<compile_context>
chip_gen: v7x
topology: tpu7x:2x2x1
jax: 0.10.0
libtpu: 0.0.40
codegen_flags: <defaults>
</compile_context>

<pallas_src>
import functools
import math

import jax
import jax.numpy as jnp
from jax.experimental import pallas as pl
from jax.experimental.pallas import tpu as pltpu


MXU_DTYPE = jnp.bfloat16      # matmul input dtype (accumulation is always f32)
LN_EPS = 1e-5
ROW_TILE_TARGET = 256         # row-tile target; fits comfortably in v7x's 64 MiB VMEM


def _row_tile(m, target=ROW_TILE_TARGET):
    """Largest multiple-of-8 divisor of m that is <= target (else m itself)."""
    if m <= target:
        return m
    best = m
    for tm in range(8, target + 1, 8):
        if m % tm == 0:
            best = tm
    return best


# ----------------------------- Pallas kernels ------------------------------

def _linear_bias_kernel(x_ref, w_ref, b_ref, o_ref):
    """y = x @ w + b for one row tile.  bf16 MXU inputs, f32 accumulation."""
    y = jnp.dot(x_ref[...].astype(MXU_DTYPE), w_ref[...],
                preferred_element_type=jnp.float32) + b_ref[...]
    o_ref[...] = y.astype(o_ref.dtype)


def _attn_block_kernel(h_ref, wqkv_ref, bqkv_ref, wo_ref, bo_ref,
                       g_ref, beta_ref, o_ref, *, num_heads, scale, eps):
    """Fused attention sub-block for ONE batch element (all heads in VMEM):

       qkv = h @ Wqkv + b; per-head softmax(q k^T * scale) v;
       a = concat(heads) @ Wo + bo;  out = LayerNorm(h + a).
    """
    h = h_ref[0]                                   # (S, H) f32
    S, H = h.shape
    dH = H // num_heads

    qkv = jnp.dot(h.astype(MXU_DTYPE), wqkv_ref[...],
                  preferred_element_type=jnp.float32) + bqkv_ref[...]   # (S, 3H)
    q = qkv[:, :H] * scale                          # fold scale into q (one VALU pass)
    k = qkv[:, H:2 * H]
    v = qkv[:, 2 * H:]

    head_outs = []
    for hd in range(num_heads):                    # static unroll over heads
        lo = hd * dH
        qh = q[:, lo:lo + dH].astype(MXU_DTYPE)
        kh = k[:, lo:lo + dH].astype(MXU_DTYPE)
        vh = v[:, lo:lo + dH].astype(MXU_DTYPE)
        # scores = q @ k^T (contraction on the head dim of both operands)
        s = jax.lax.dot_general(qh, kh, (((1,), (1,)), ((), ())),
                                preferred_element_type=jnp.float32)
        m = jnp.max(s, axis=-1, keepdims=True)
        p = jnp.exp(s - m)
        # EUP approx reciprocal instead of a VALU divide.
        p = p * pl.reciprocal(jnp.sum(p, axis=-1, keepdims=True), approx=True)
        head_outs.append(jnp.dot(p.astype(MXU_DTYPE), vh,
                                 preferred_element_type=jnp.float32))
    a = jnp.concatenate(head_outs, axis=-1)        # (S, H)

    a = jnp.dot(a.astype(MXU_DTYPE), wo_ref[...],
                preferred_element_type=jnp.float32) + bo_ref[...]

    # residual + LayerNorm epilogue (f32)
    t = h + a
    mean = jnp.mean(t, axis=-1, keepdims=True)
    var = jnp.mean(jnp.square(t - mean), axis=-1, keepdims=True)
    out = (t - mean) * jax.lax.rsqrt(var + eps) * g_ref[...] + beta_ref[...]
    o_ref[0] = out.astype(o_ref.dtype)


def _ffn_block_kernel(h_ref, w1_ref, b1_ref, w2_ref, b2_ref,
                      g_ref, beta_ref, o_ref, *, eps):
    """Fused FFN sub-block for one row tile:
       out = LayerNorm(h + W2 @ relu(W1 @ h + b1) + b2)."""
    h = h_ref[...]                                 # (tm, H) f32
    f = jnp.dot(h.astype(MXU_DTYPE), w1_ref[...],
                preferred_element_type=jnp.float32) + b1_ref[...]       # (tm, F)
    f = jnp.maximum(f, 0.0)
    f = jnp.dot(f.astype(MXU_DTYPE), w2_ref[...],
                preferred_element_type=jnp.float32) + b2_ref[...]       # (tm, H)
    t = h + f
    mean = jnp.mean(t, axis=-1, keepdims=True)
    var = jnp.mean(jnp.square(t - mean), axis=-1, keepdims=True)
    out = (t - mean) * jax.lax.rsqrt(var + eps) * g_ref[...] + beta_ref[...]
    o_ref[...] = out.astype(o_ref.dtype)


# ------------------------------ kernel wrappers ------------------------------

def input_projection(x, w, b):
    """x: (M, K), w: (K, N) bf16, b: (1, N) -> (M, N); row-tiled, pipelined."""
    M, K = x.shape
    N = w.shape[1]
    tm = _row_tile(M)
    return pl.pallas_call(
        _linear_bias_kernel,
        out_shape=jax.ShapeDtypeStruct((M, N), jnp.float32),
        grid=(M // tm,),
        in_specs=[
            pl.BlockSpec((tm, K), lambda i: (i, 0)),
            pl.BlockSpec((K, N), lambda i: (0, 0)),
            pl.BlockSpec((1, N), lambda i: (0, 0)),
        ],
        out_specs=pl.BlockSpec((tm, N), lambda i: (i, 0)),
        compiler_params=pltpu.CompilerParams(dimension_semantics=("parallel",)),
    )(x, w, b)


def attention_block(h, layer, *, num_heads):
    """Fused attention sub-block.  h: (B, S, H) -> (B, S, H); grid over batch."""
    B, S, H = h.shape
    scale = 1.0 / math.sqrt(H // num_heads)
    kernel = functools.partial(_attn_block_kernel, num_heads=num_heads,
                               scale=scale, eps=LN_EPS)
    row_spec = pl.BlockSpec((1, S, H), lambda b: (b, 0, 0))

    def full(shape):
        return pl.BlockSpec(shape, lambda b: (0, 0))

    return pl.pallas_call(
        kernel,
        out_shape=jax.ShapeDtypeStruct((B, S, H), jnp.float32),
        grid=(B,),
        in_specs=[
            row_spec,
            full((H, 3 * H)), full((1, 3 * H)),
            full((H, H)), full((1, H)),
            full((1, H)), full((1, H)),
        ],
        out_specs=row_spec,
        compiler_params=pltpu.CompilerParams(dimension_semantics=("parallel",)),
    )(h, layer["w_qkv"], layer["b_qkv"], layer["w_o"], layer["b_o"],
      layer["g1"], layer["be1"])


def ffn_block(h, layer):
    """Fused FFN sub-block.  h: (M, H) -> (M, H); row-tiled grid."""
    M, H = h.shape
    F = layer["w1"].shape[1]
    tm = _row_tile(M)
    kernel = functools.partial(_ffn_block_kernel, eps=LN_EPS)
    return pl.pallas_call(
        kernel,
        out_shape=jax.ShapeDtypeStruct((M, H), jnp.float32),
        grid=(M // tm,),
        in_specs=[
            pl.BlockSpec((tm, H), lambda i: (i, 0)),
            pl.BlockSpec((H, F), lambda i: (0, 0)),
            pl.BlockSpec((1, F), lambda i: (0, 0)),
            pl.BlockSpec((F, H), lambda i: (0, 0)),
            pl.BlockSpec((1, H), lambda i: (0, 0)),
            pl.BlockSpec((1, H), lambda i: (0, 0)),
            pl.BlockSpec((1, H), lambda i: (0, 0)),
        ],
        out_specs=pl.BlockSpec((tm, H), lambda i: (i, 0)),
        compiler_params=pltpu.CompilerParams(dimension_semantics=("parallel",)),
    )(h, layer["w1"], layer["b1"], layer["w2"], layer["b2"],
      layer["g2"], layer["be2"])


# ------------------------------ model wrapper -------------------------------

def init_params(key, input_dim, hidden_dim=128, num_layers=2,
                dim_feedforward=None):
    if dim_feedforward is None:
        dim_feedforward = hidden_dim * 4
    H, F = hidden_dim, dim_feedforward

    def nrm(k, shape, scale=0.02):
        return (scale * jax.random.normal(k, shape)).astype(jnp.float32)

    keys = jax.random.split(key, 2 + 4 * num_layers)
    params = {
        "w_in": nrm(keys[0], (input_dim, H)),
        "b_in": jnp.zeros((1, H), jnp.float32),
        "w_out": nrm(keys[1], (H, 1)),
        "b_out": jnp.zeros((1, 1), jnp.float32),
        "layers": [],
    }
    for l in range(num_layers):
        k0, k1, k2, k3 = keys[2 + 4 * l: 6 + 4 * l]
        params["layers"].append({
            "w_qkv": nrm(k0, (H, 3 * H)),      # fused in_proj (q|k|v)
            "b_qkv": jnp.zeros((1, 3 * H), jnp.float32),
            "w_o": nrm(k1, (H, H)),            # attn out_proj
            "b_o": jnp.zeros((1, H), jnp.float32),
            "g1": jnp.ones((1, H), jnp.float32),
            "be1": jnp.zeros((1, H), jnp.float32),
            "w1": nrm(k2, (H, F)),
            "b1": jnp.zeros((1, F), jnp.float32),
            "w2": nrm(k3, (F, H)),
            "b2": jnp.zeros((1, H), jnp.float32),
            "g2": jnp.ones((1, H), jnp.float32),
            "be2": jnp.zeros((1, H), jnp.float32),
        })
    return params


def _cast_matmul_weights(params):
    """bf16-cast the MXU weight operands once per call (half the weight DMA)."""
    out = {
        "w_in": params["w_in"].astype(MXU_DTYPE),
        "b_in": params["b_in"],
        "w_out": params["w_out"],
        "b_out": params["b_out"],
        "layers": [],
    }
    for layer in params["layers"]:
        l = dict(layer)
        for name in ("w_qkv", "w_o", "w1", "w2"):
            l[name] = layer[name].astype(MXU_DTYPE)
        out["layers"].append(l)
    return out


@functools.partial(jax.jit, static_argnames=("num_heads",))
def transformer_audio_encoder(x, params, *, num_heads):
    """Returns (encoded (B, H), sentiment (B, 1))."""
    # TODO(synk): nn.Dropout is stochastic; implemented as identity (eval-mode semantics).
    if x.ndim == 2:                       # mirrors the unsqueeze(1) branch
        x = x[:, None, :]
    B, S, D = x.shape
    H = params["w_in"].shape[1]

    p = _cast_matmul_weights(params)

    h = input_projection(x.reshape(B * S, D), p["w_in"], p["b_in"])
    h = h.reshape(B, S, H)

    for layer in p["layers"]:
        h = attention_block(h, layer, num_heads=num_heads)           # attn + add&LN
        h = ffn_block(h.reshape(B * S, H), layer).reshape(B, S, H)   # ffn + add&LN

    encoded = h[:, 0, :]                                             # (B, H)
    # H -> 1 projection in plain XLA: a 1-wide Pallas output is pure
    # masked-store / launch overhead.
    sentiment = encoded @ params["w_out"] + params["b_out"]          # (B, 1)
    return encoded, sentiment


# ------------------------- pure-JAX reference check -------------------------

def _reference(x, params, num_heads):
    if x.ndim == 2:
        x = x[:, None, :]
    B, S, _ = x.shape
    H = params["w_in"].shape[1]
    dH = H // num_heads
    h = x @ params["w_in"] + params["b_in"]
    for layer in params["layers"]:
        qkv = h @ layer["w_qkv"] + layer["b_qkv"]
        q, k, v = jnp.split(qkv, 3, axis=-1)
        q = q.reshape(B, S, num_heads, dH).transpose(0, 2, 1, 3)
        k = k.reshape(B, S, num_heads, dH).transpose(0, 2, 1, 3)
        v = v.reshape(B, S, num_heads, dH).transpose(0, 2, 1, 3)
        s = jnp.einsum("bhqd,bhkd->bhqk", q, k) / math.sqrt(dH)
        p = jax.nn.softmax(s, axis=-1)
        a = jnp.einsum("bhqk,bhkd->bhqd", p, v).transpose(0, 2, 1, 3).reshape(B, S, H)
        a = a @ layer["w_o"] + layer["b_o"]
        t = h + a
        t = (t - t.mean(-1, keepdims=True)) / jnp.sqrt(t.var(-1, keepdims=True) + LN_EPS)
        h = t * layer["g1"] + layer["be1"]
        f = jnp.maximum(h @ layer["w1"] + layer["b1"], 0.0) @ layer["w2"] + layer["b2"]
        t = h + f
        t = (t - t.mean(-1, keepdims=True)) / jnp.sqrt(t.var(-1, keepdims=True) + LN_EPS)
        h = t * layer["g2"] + layer["be2"]
    enc = h[:, 0, :]
    return enc, enc @ params["w_out"] + params["b_out"]


# ----------------------------------- main ------------------------------------

if __name__ == "__main__":
    key = jax.random.PRNGKey(0)
    k_param, k_x = jax.random.split(key)

    B, S, INPUT_DIM, HIDDEN, HEADS = 2, 8, 16, 32, 4   # head_dim = 8
    params = init_params(k_param, INPUT_DIM, hidden_dim=HIDDEN, num_layers=2)
    x = jax.random.normal(k_x, (B, S, INPUT_DIM), dtype=jnp.float32)

    encoded, sentiment = transformer_audio_encoder(x, params, num_heads=HEADS)
    encoded = jax.block_until_ready(encoded)
    sentiment = jax.block_until_ready(sentiment)

    enc_ref, sent_ref = _reference(x, params, HEADS)
    assert encoded.shape == (B, HIDDEN) and sentiment.shape == (B, 1)
    # bf16 MXU inputs (f32 accumulation) + approx softmax reciprocal ->
    # looser tolerance than the pure-f32 reference.
    assert jnp.allclose(encoded, enc_ref, atol=5e-2, rtol=5e-2), \
        float(jnp.max(jnp.abs(encoded - enc_ref)))
    assert jnp.allclose(sentiment, sent_ref, atol=5e-2, rtol=5e-2), \
        float(jnp.max(jnp.abs(sentiment - sent_ref)))

    print("KERNEL_OK")
</pallas_src>

<mosaic_0001>
module attributes {stable_mosaic.version = 11 : i64} {
  func.func @_linear_bias_kernel(%arg0: i32, %arg1: memref<16x16xf32, #tpu.memory_space<vmem>>, %arg2: memref<16x32xbf16, #tpu.memory_space<vmem>>, %arg3: memref<1x32xf32, #tpu.memory_space<vmem>>, %arg4: memref<16x32xf32, #tpu.memory_space<vmem>>) attributes {dimension_semantics = [#tpu.dimension_semantics<parallel>], iteration_bounds = array<i64: 1>, scalar_prefetch = 0 : i64, scratch_operands = 0 : i64, tpu.core_type = #tpu.core_type<tc>, window_params = [{transform_indices = @transform_0, window_bounds = array<i64: 16, 16>}, {pipeline_mode = #tpu.pipeline_mode<synchronous>, transform_indices = @transform_1, window_bounds = array<i64: 16, 32>}, {pipeline_mode = #tpu.pipeline_mode<synchronous>, transform_indices = @transform_2, window_bounds = array<i64: 1, 32>}, {transform_indices = @transform_3, window_bounds = array<i64: 16, 32>}]} {
    %c0 = arith.constant 0 : index
    %c0_0 = arith.constant 0 : index
    %0 = vector.load %arg1[%c0, %c0_0] : memref<16x16xf32, #tpu.memory_space<vmem>>, vector<16x16xf32>
    %1 = arith.truncf %0 : vector<16x16xf32> to vector<16x16xbf16>
    %c0_1 = arith.constant 0 : index
    %c0_2 = arith.constant 0 : index
    %2 = vector.load %arg2[%c0_1, %c0_2] : memref<16x32xbf16, #tpu.memory_space<vmem>>, vector<16x32xbf16>
    %cst = arith.constant dense<0.000000e+00> : vector<16x32xf32>
    %3 = tpu.matmul %1, %2, %cst {dimension_numbers = #tpu.dot_dimension_numbers<[1], [0], [0], [1], [0, 0, 1, 1], [], []>} : vector<16x16xbf16>, vector<16x32xbf16>, vector<16x32xf32> -> vector<16x32xf32>
    %c0_3 = arith.constant 0 : index
    %c0_4 = arith.constant 0 : index
    %4 = vector.load %arg3[%c0_3, %c0_4] : memref<1x32xf32, #tpu.memory_space<vmem>>, vector<1x32xf32>
    %5 = vector.broadcast %4 : vector<1x32xf32> to vector<16x32xf32>
    %6 = arith.addf %3, %5 : vector<16x32xf32>
    %c0_5 = arith.constant 0 : index
    %c0_6 = arith.constant 0 : index
    %7 = vector.load %arg4[%c0_5, %c0_6] : memref<16x32xf32, #tpu.memory_space<vmem>>, vector<16x32xf32>
    tpu.vector_store %arg4[%c0_5, %c0_6], %6 {strides = array<i32>} : memref<16x32xf32, #tpu.memory_space<vmem>>, vector<16x32xf32>,
    return
  }
  func.func @transform_0(%arg0: i32) -> (i32, i32) {
    %c0_i32 = arith.constant 0 : i32
    %c0_i32_0 = arith.constant 0 : i32
    return %arg0, %c0_i32 : i32, i32
  }
  func.func @transform_1(%arg0: i32) -> (i32, i32) {
    %c0_i32 = arith.constant 0 : i32
    %c0_i32_0 = arith.constant 0 : i32
    %c0_i32_1 = arith.constant 0 : i32
    return %c0_i32, %c0_i32_0 : i32, i32
  }
  func.func @transform_2(%arg0: i32) -> (i32, i32) {
    %c0_i32 = arith.constant 0 : i32
    %c0_i32_0 = arith.constant 0 : i32
    %c0_i32_1 = arith.constant 0 : i32
    return %c0_i32, %c0_i32_0 : i32, i32
  }
  func.func @transform_3(%arg0: i32) -> (i32, i32) {
    %c0_i32 = arith.constant 0 : i32
    %c0_i32_0 = arith.constant 0 : i32
    return %arg0, %c0_i32 : i32, i32
  }
}

module attributes {stable_mosaic.version = 11 : i64} {
  func.func @_attn_block_kernel(%arg0: i32, %arg1: memref<1x8x32xf32, #tpu.memory_space<vmem>>, %arg2: memref<32x96xbf16, #tpu.memory_space<vmem>>, %arg3: memref<1x96xf32, #tpu.memory_space<vmem>>, %arg4: memref<32x32xbf16, #tpu.memory_space<vmem>>, %arg5: memref<1x32xf32, #tpu.memory_space<vmem>>, %arg6: memref<1x32xf32, #tpu.memory_space<vmem>>, %arg7: memref<1x32xf32, #tpu.memory_space<vmem>>, %arg8: memref<1x8x32xf32, #tpu.memory_space<vmem>>) attributes {dimension_semantics = [#tpu.dimension_semantics<parallel>], iteration_bounds = array<i64: 2>, scalar_prefetch = 0 : i64, scratch_operands = 0 : i64, tpu.core_type = #tpu.core_type<tc>, window_params = [{transform_indices = @transform_0, window_bounds = array<i64: 1, 8, 32>}, {pipeline_mode = #tpu.pipeline_mode<synchronous>, transform_indices = @transform_1, window_bounds = array<i64: 32, 96>}, {pipeline_mode = #tpu.pipeline_mode<synchronous>, transform_indices = @transform_2, window_bounds = array<i64: 1, 96>}, {pipeline_mode = #tpu.pipeline_mode<synchronous>, transform_indices = @transform_3, window_bounds = array<i64: 32, 32>}, {pipeline_mode = #tpu.pipeline_mode<synchronous>, transform_indices = @transform_4, window_bounds = array<i64: 1, 32>}, {pipeline_mode = #tpu.pipeline_mode<synchronous>, transform_indices = @transform_5, window_bounds = array<i64: 1, 32>}, {pipeline_mode = #tpu.pipeline_mode<synchronous>, transform_indices = @transform_6, window_bounds = array<i64: 1, 32>}, {transform_indices = @transform_7, window_bounds = array<i64: 1, 8, 32>}]} {
    %c0 = arith.constant 0 : index
    %c0_0 = arith.constant 0 : index
    %c0_1 = arith.constant 0 : index
    %0 = vector.load %arg1[%c0, %c0_0, %c0_1] : memref<1x8x32xf32, #tpu.memory_space<vmem>>, vector<1x8x32xf32>
    %1 = vector.shape_cast %0 : vector<1x8x32xf32> to vector<8x32xf32>
    %2 = arith.truncf %1 : vector<8x32xf32> to vector<8x32xbf16>
    %c0_2 = arith.constant 0 : index
    %c0_3 = arith.constant 0 : index
    %3 = vector.load %arg2[%c0_2, %c0_3] : memref<32x96xbf16, #tpu.memory_space<vmem>>, vector<32x96xbf16>
    %cst = arith.constant dense<0.000000e+00> : vector<8x96xf32>
    %4 = tpu.matmul %2, %3, %cst {dimension_numbers = #tpu.dot_dimension_numbers<[1], [0], [0], [1], [0, 0, 1, 1], [], []>} : vector<8x32xbf16>, vector<32x96xbf16>, vector<8x96xf32> -> vector<8x96xf32>
    %c0_4 = arith.constant 0 : index
    %c0_5 = arith.constant 0 : index
    %5 = vector.load %arg3[%c0_4, %c0_5] : memref<1x96xf32, #tpu.memory_space<vmem>>, vector<1x96xf32>
    %6 = vector.broadcast %5 : vector<1x96xf32> to vector<8x96xf32>
    %7 = arith.addf %4, %6 : vector<8x96xf32>
    %8 = vector.extract_strided_slice %7 {offsets = [0, 0], sizes = [8, 32], strides = [1, 1]} : vector<8x96xf32> to vector<8x32xf32>
    %cst_6 = arith.constant 0.353553385 : f32
    %9 = vector.broadcast %cst_6 : f32 to vector<8x32xf32>
    %10 = arith.mulf %8, %9 : vector<8x32xf32>
    %11 = vector.extract_strided_slice %7 {offsets = [0, 32], sizes = [8, 32], strides = [1, 1]} : vector<8x96xf32> to vector<8x32xf32>
    %12 = vector.extract_strided_slice %7 {offsets = [0, 64], sizes = [8, 32], strides = [1, 1]} : vector<8x96xf32> to vector<8x32xf32>
    %13 = vector.extract_strided_slice %10 {offsets = [0, 0], sizes = [8, 8], strides = [1, 1]} : vector<8x32xf32> to vector<8x8xf32>
    %14 = arith.truncf %13 : vector<8x8xf32> to vector<8x8xbf16>
    %15 = vector.extract_strided_slice %11 {offsets = [0, 0], sizes = [8, 8], strides = [1, 1]} : vector<8x32xf32> to vector<8x8xf32>
    %16 = arith.truncf %15 : vector<8x8xf32> to vector<8x8xbf16>
    %17 = vector.extract_strided_slice %12 {offsets = [0, 0], sizes = [8, 8], strides = [1, 1]} : vector<8x32xf32> to vector<8x8xf32>
    %18 = arith.truncf %17 : vector<8x8xf32> to vector<8x8xbf16>
    %cst_7 = arith.constant dense<0.000000e+00> : vector<8x8xf32>
    %19 = tpu.matmul %14, %16, %cst_7 {dimension_numbers = #tpu.dot_dimension_numbers<[1], [1], [0], [0], [0, 0, 1, 0], [], []>} : vector<8x8xbf16>, vector<8x8xbf16>, vector<8x8xf32> -> vector<8x8xf32>
    %cst_8 = arith.constant dense<0xFF800000> : vector<8xf32>
    %20 = vector.multi_reduction <maximumf>, %19, %cst_8 [1] : vector<8x8xf32> to vector<8xf32>
    %21 = vector.shape_cast %20 : vector<8xf32> to vector<8x1xf32>
    %22 = vector.broadcast %21 : vector<8x1xf32> to vector<8x8xf32>
    %23 = arith.subf %19, %22 : vector<8x8xf32>
    %24 = math.exp %23 : vector<8x8xf32>
    %cst_9 = arith.constant dense<0.000000e+00> : vector<8xf32>
    %25 = vector.multi_reduction <add>, %24, %cst_9 [1] : vector<8x8xf32> to vector<8xf32>
    %26 = vector.shape_cast %25 : vector<8xf32> to vector<8x1xf32>
    %27 = tpu.reciprocal %26 {approx = true} : vector<8x1xf32> -> vector<8x1xf32>
    %28 = vector.broadcast %27 : vector<8x1xf32> to vector<8x8xf32>
    %29 = arith.mulf %24, %28 : vector<8x8xf32>
    %30 = arith.truncf %29 : vector<8x8xf32> to vector<8x8xbf16>
    %cst_10 = arith.constant dense<0.000000e+00> : vector<8x8xf32>
    %31 = tpu.matmul %30, %18, %cst_10 {dimension_numbers = #tpu.dot_dimension_numbers<[1], [0], [0], [1], [0, 0, 1, 1], [], []>} : vector<8x8xbf16>, vector<8x8xbf16>, vector<8x8xf32> -> vector<8x8xf32>
    %32 = vector.extract_strided_slice %10 {offsets = [0, 8], sizes = [8, 8], strides = [1, 1]} : vector<8x32xf32> to vector<8x8xf32>
    %33 = arith.truncf %32 : vector<8x8xf32> to vector<8x8xbf16>
    %34 = vector.extract_strided_slice %11 {offsets = [0, 8], sizes = [8, 8], strides = [1, 1]} : vector<8x32xf32> to vector<8x8xf32>
    %35 = arith.truncf %34 : vector<8x8xf32> to vector<8x8xbf16>
    %36 = vector.extract_strided_slice %12 {offsets = [0, 8], sizes = [8, 8], strides = [1, 1]} : vector<8x32xf32> to vector<8x8xf32>
    %37 = arith.truncf %36 : vector<8x8xf32> to vector<8x8xbf16>
    %cst_11 = arith.constant dense<0.000000e+00> : vector<8x8xf32>
    %38 = tpu.matmul %33, %35, %cst_11 {dimension_numbers = #tpu.dot_dimension_numbers<[1], [1], [0], [0], [0, 0, 1, 0], [], []>} : vector<8x8xbf16>, vector<8x8xbf16>, vector<8x8xf32> -> vector<8x8xf32>
    %cst_12 = arith.constant dense<0xFF800000> : vector<8xf32>
    %39 = vector.multi_reduction <maximumf>, %38, %cst_12 [1] : vector<8x8xf32> to vector<8xf32>
    %40 = vector.shape_cast %39 : vector<8xf32> to vector<8x1xf32>
    %41 = vector.broadcast %40 : vector<8x1xf32> to vector<8x8xf32>
    %42 = arith.subf %38, %41 : vector<8x8xf32>
    %43 = math.exp %42 : vector<8x8xf32>
    %cst_13 = arith.constant dense<0.000000e+00> : vector<8xf32>
    %44 = vector.multi_reduction <add>, %43, %cst_13 [1] : vector<8x8xf32> to vector<8xf32>
    %45 = vector.shape_cast %44 : vector<8xf32> to vector<8x1xf32>
    %46 = tpu.reciprocal %45 {approx = true} : vector<8x1xf32> -> vector<8x1xf32>
    %47 = vector.broadcast %46 : vector<8x1xf32> to vector<8x8xf32>
    %48 = arith.mulf %43, %47 : vector<8x8xf32>
    %49 = arith.truncf %48 : vector<8x8xf32> to vector<8x8xbf16>
    %cst_14 = arith.constant dense<0.000000e+00> : vector<8x8xf32>
    %50 = tpu.matmul %49, %37, %cst_14 {dimension_numbers = #tpu.dot_dimension_numbers<[1], [0], [0], [1], [0, 0, 1, 1], [], []>} : vector<8x8xbf16>, vector<8x8xbf16>, vector<8x8xf32> -> vector<8x8xf32>
    %51 = vector.extract_strided_slice %10 {offsets = [0, 16], sizes = [8, 8], strides = [1, 1]} : vector<8x32xf32> to vector<8x8xf32>
    %52 = arith.truncf %51 : vector<8x8xf32> to vector<8x8xbf16>
    %53 = vector.extract_strided_slice %11 {offsets = [0, 16], sizes = [8, 8], strides = [1, 1]} : vector<8x32xf32> to vector<8x8xf32>
    %54 = arith.truncf %53 : vector<8x8xf32> to vector<8x8xbf16>
    %55 = vector.extract_strided_slice %12 {offsets = [0, 16], sizes = [8, 8], strides = [1, 1]} : vector<8x32xf32> to vector<8x8xf32>
    %56 = arith.truncf %55 : vector<8x8xf32> to vector<8x8xbf16>
    %cst_15 = arith.constant dense<0.000000e+00> : vector<8x8xf32>
    %57 = tpu.matmul %52, %54, %cst_15 {dimension_numbers = #tpu.dot_dimension_numbers<[1], [1], [0], [0], [0, 0, 1, 0], [], []>} : vector<8x8xbf16>, vector<8x8xbf16>, vector<8x8xf32> -> vector<8x8xf32>
    %cst_16 = arith.constant dense<0xFF800000> : vector<8xf32>
    %58 = vector.multi_reduction <maximumf>, %57, %cst_16 [1] : vector<8x8xf32> to vector<8xf32>
    %59 = vector.shape_cast %58 : vector<8xf32> to vector<8x1xf32>
    %60 = vector.broadcast %59 : vector<8x1xf32> to vector<8x8xf32>
    %61 = arith.subf %57, %60 : vector<8x8xf32>
    %62 = math.exp %61 : vector<8x8xf32>
    %cst_17 = arith.constant dense<0.000000e+00> : vector<8xf32>
    %63 = vector.multi_reduction <add>, %62, %cst_17 [1] : vector<8x8xf32> to vector<8xf32>
    %64 = vector.shape_cast %63 : vector<8xf32> to vector<8x1xf32>
    %65 = tpu.reciprocal %64 {approx = true} : vector<8x1xf32> -> vector<8x1xf32>
    %66 = vector.broadcast %65 : vector<8x1xf32> to vector<8x8xf32>
    %67 = arith.mulf %62, %66 : vector<8x8xf32>
    %68 = arith.truncf %67 : vector<8x8xf32> to vector<8x8xbf16>
    %cst_18 = arith.constant dense<0.000000e+00> : vector<8x8xf32>
    %69 = tpu.matmul %68, %56, %cst_18 {dimension_numbers = #tpu.dot_dimension_numbers<[1], [0], [0], [1], [0, 0, 1, 1], [], []>} : vector<8x8xbf16>, vector<8x8xbf16>, vector<8x8xf32> -> vector<8x8xf32>
    %70 = vector.extract_strided_slice %10 {offsets = [0, 24], sizes = [8, 8], strides = [1, 1]} : vector<8x32xf32> to vector<8x8xf32>
    %71 = arith.truncf %70 : vector<8x8xf32> to vector<8x8xbf16>
    %72 = vector.extract_strided_slice %11 {offsets = [0, 24], sizes = [8, 8], strides = [1, 1]} : vector<8x32xf32> to vector<8x8xf32>
    %73 = arith.truncf %72 : vector<8x8xf32> to vector<8x8xbf16>
    %74 = vector.extract_strided_slice %12 {offsets = [0, 24], sizes = [8, 8], strides = [1, 1]} : vector<8x32xf32> to vector<8x8xf32>
    %75 = arith.truncf %74 : vector<8x8xf32> to vector<8x8xbf16>
    %cst_19 = arith.constant dense<0.000000e+00> : vector<8x8xf32>
    %76 = tpu.matmul %71, %73, %cst_19 {dimension_numbers = #tpu.dot_dimension_numbers<[1], [1], [0], [0], [0, 0, 1, 0], [], []>} : vector<8x8xbf16>, vector<8x8xbf16>, vector<8x8xf32> -> vector<8x8xf32>
    %cst_20 = arith.constant dense<0xFF800000> : vector<8xf32>
    %77 = vector.multi_reduction <maximumf>, %76, %cst_20 [1] : vector<8x8xf32> to vector<8xf32>
    %78 = vector.shape_cast %77 : vector<8xf32> to vector<8x1xf32>
    %79 = vector.broadcast %78 : vector<8x1xf32> to vector<8x8xf32>
    %80 = arith.subf %76, %79 : vector<8x8xf32>
    %81 = math.exp %80 : vector<8x8xf32>
    %cst_21 = arith.constant dense<0.000000e+00> : vector<8xf32>
    %82 = vector.multi_reduction <add>, %81, %cst_21 [1] : vector<8x8xf32> to vector<8xf32>
    %83 = vector.shape_cast %82 : vector<8xf32> to vector<8x1xf32>
    %84 = tpu.reciprocal %83 {approx = true} : vector<8x1xf32> -> vector<8x1xf32>
    %85 = vector.broadcast %84 : vector<8x1xf32> to vector<8x8xf32>
    %86 = arith.mulf %81, %85 : vector<8x8xf32>
    %87 = arith.truncf %86 : vector<8x8xf32> to vector<8x8xbf16>
    %cst_22 = arith.constant dense<0.000000e+00> : vector<8x8xf32>
    %88 = tpu.matmul %87, %75, %cst_22 {dimension_numbers = #tpu.dot_dimension_numbers<[1], [0], [0], [1], [0, 0, 1, 1], [], []>} : vector<8x8xbf16>, vector<8x8xbf16>, vector<8x8xf32> -> vector<8x8xf32>
    %89 = tpu.concatenate %31, %50, %69, %88 in 1 : vector<8x8xf32>, vector<8x8xf32>, vector<8x8xf32>, vector<8x8xf32> -> vector<8x32xf32>
    %90 = arith.truncf %89 : vector<8x32xf32> to vector<8x32xbf16>
    %c0_23 = arith.constant 0 : index
    %c0_24 = arith.constant 0 : index
    %91 = vector.load %arg4[%c0_23, %c0_24] : memref<32x32xbf16, #tpu.memory_space<vmem>>, vector<32x32xbf16>
    %cst_25 = arith.constant dense<0.000000e+00> : vector<8x32xf32>
    %92 = tpu.matmul %90, %91, %cst_25 {dimension_numbers = #tpu.dot_dimension_numbers<[1], [0], [0], [1], [0, 0, 1, 1], [], []>} : vector<8x32xbf16>, vector<32x32xbf16>, vector<8x32xf32> -> vector<8x32xf32>
    %c0_26 = arith.constant 0 : index
    %c0_27 = arith.constant 0 : index
    %93 = vector.load %arg5[%c0_26, %c0_27] : memref<1x32xf32, #tpu.memory_space<vmem>>, vector<1x32xf32>
    %94 = vector.broadcast %93 : vector<1x32xf32> to vector<8x32xf32>
    %95 = arith.addf %92, %94 : vector<8x32xf32>
    %96 = arith.addf %1, %95 : vector<8x32xf32>
    %cst_28 = arith.constant dense<0.000000e+00> : vector<8xf32>
    %97 = vector.multi_reduction <add>, %96, %cst_28 [1] : vector<8x32xf32> to vector<8xf32>
    %98 = vector.shape_cast %97 : vector<8xf32> to vector<8x1xf32>
    %cst_29 = arith.constant 3.200000e+01 : f32
    %99 = vector.broadcast %cst_29 : f32 to vector<8x1xf32>
    %100 = arith.divf %98, %99 : vector<8x1xf32>
    %101 = vector.broadcast %100 : vector<8x1xf32> to vector<8x32xf32>
    %102 = arith.subf %96, %101 : vector<8x32xf32>
    %103 = arith.mulf %102, %102 : vector<8x32xf32>
    %cst_30 = arith.constant dense<0.000000e+00> : vector<8xf32>
    %104 = vector.multi_reduction <add>, %103, %cst_30 [1] : vector<8x32xf32> to vector<8xf32>
    %105 = vector.shape_cast %104 : vector<8xf32> to vector<8x1xf32>
    %cst_31 = arith.constant 3.200000e+01 : f32
    %106 = vector.broadcast %cst_31 : f32 to vector<8x1xf32>
    %107 = arith.divf %105, %106 : vector<8x1xf32>
    %108 = vector.broadcast %100 : vector<8x1xf32> to vector<8x32xf32>
    %109 = arith.subf %96, %108 : vector<8x32xf32>
    %cst_32 = arith.constant 9.99999974E-6 : f32
    %110 = vector.broadcast %cst_32 : f32 to vector<8x1xf32>
    %111 = arith.addf %107, %110 : vector<8x1xf32>
    %112 = math.rsqrt %111 : vector<8x1xf32>
    %113 = vector.broadcast %112 : vector<8x1xf32> to vector<8x32xf32>
    %114 = arith.mulf %109, %113 : vector<8x32xf32>
    %c0_33 = arith.constant 0 : index
    %c0_34 = arith.constant 0 : index
    %115 = vector.load %arg6[%c0_33, %c0_34] : memref<1x32xf32, #tpu.memory_space<vmem>>, vector<1x32xf32>
    %116 = vector.broadcast %115 : vector<1x32xf32> to vector<8x32xf32>
    %117 = arith.mulf %114, %116 : vector<8x32xf32>
    %c0_35 = arith.constant 0 : index
    %c0_36 = arith.constant 0 : index
    %118 = vector.load %arg7[%c0_35, %c0_36] : memref<1x32xf32, #tpu.memory_space<vmem>>, vector<1x32xf32>
    %119 = vector.broadcast %118 : vector<1x32xf32> to vector<8x32xf32>
    %120 = arith.addf %117, %119 : vector<8x32xf32>
    %c0_37 = arith.constant 0 : index
    %c0_38 = arith.constant 0 : index
    %c0_39 = arith.constant 0 : index
    %121 = vector.load %arg8[%c0_37, %c0_38, %c0_39] : memref<1x8x32xf32, #tpu.memory_space<vmem>>, vector<1x8x32xf32>
    %122 = vector.shape_cast %121 : vector<1x8x32xf32> to vector<8x32xf32>
    %123 = vector.shape_cast %120 : vector<8x32xf32> to vector<1x8x32xf32>
    tpu.vector_store %arg8[%c0_37, %c0_38, %c0_39], %123 {strides = array<i32>} : memref<1x8x32xf32, #tpu.memory_space<vmem>>, vector<1x8x32xf32>,
    return
  }
  func.func @transform_0(%arg0: i32) -> (i32, i32, i32) {
    %c0_i32 = arith.constant 0 : i32
    %c0_i32_0 = arith.constant 0 : i32
    %c0_i32_1 = arith.constant 0 : i32
    return %arg0, %c0_i32, %c0_i32_0 : i32, i32, i32
  }
  func.func @transform_1(%arg0: i32) -> (i32, i32) {
    %c0_i32 = arith.constant 0 : i32
    %c0_i32_0 = arith.constant 0 : i32
    %c0_i32_1 = arith.constant 0 : i32
    return %c0_i32, %c0_i32_0 : i32, i32
  }
  func.func @transform_2(%arg0: i32) -> (i32, i32) {
    %c0_i32 = arith.constant 0 : i32
    %c0_i32_0 = arith.constant 0 : i32
    %c0_i32_1 = arith.constant 0 : i32
    return %c0_i32, %c0_i32_0 : i32, i32
  }
  func.func @transform_3(%arg0: i32) -> (i32, i32) {
    %c0_i32 = arith.constant 0 : i32
    %c0_i32_0 = arith.constant 0 : i32
    %c0_i32_1 = arith.constant 0 : i32
    return %c0_i32, %c0_i32_0 : i32, i32
  }
  func.func @transform_4(%arg0: i32) -> (i32, i32) {
    %c0_i32 = arith.constant 0 : i32
    %c0_i32_0 = arith.constant 0 : i32
    %c0_i32_1 = arith.constant 0 : i32
    return %c0_i32, %c0_i32_0 : i32, i32
  }
  func.func @transform_5(%arg0: i32) -> (i32, i32) {
    %c0_i32 = arith.constant 0 : i32
    %c0_i32_0 = arith.constant 0 : i32
    %c0_i32_1 = arith.constant 0 : i32
    return %c0_i32, %c0_i32_0 : i32, i32
  }
  func.func @transform_6(%arg0: i32) -> (i32, i32) {
    %c0_i32 = arith.constant 0 : i32
    %c0_i32_0 = arith.constant 0 : i32
    %c0_i32_1 = arith.constant 0 : i32
    return %c0_i32, %c0_i32_0 : i32, i32
  }
  func.func @transform_7(%arg0: i32) -> (i32, i32, i32) {
    %c0_i32 = arith.constant 0 : i32
    %c0_i32_0 = arith.constant 0 : i32
    %c0_i32_1 = arith.constant 0 : i32
    return %arg0, %c0_i32, %c0_i32_0 : i32, i32, i32
  }
}

module attributes {stable_mosaic.version = 11 : i64} {
  func.func @_ffn_block_kernel(%arg0: i32, %arg1: memref<16x32xf32, #tpu.memory_space<vmem>>, %arg2: memref<32x128xbf16, #tpu.memory_space<vmem>>, %arg3: memref<1x128xf32, #tpu.memory_space<vmem>>, %arg4: memref<128x32xbf16, #tpu.memory_space<vmem>>, %arg5: memref<1x32xf32, #tpu.memory_space<vmem>>, %arg6: memref<1x32xf32, #tpu.memory_space<vmem>>, %arg7: memref<1x32xf32, #tpu.memory_space<vmem>>, %arg8: memref<16x32xf32, #tpu.memory_space<vmem>>) attributes {dimension_semantics = [#tpu.dimension_semantics<parallel>], iteration_bounds = array<i64: 1>, scalar_prefetch = 0 : i64, scratch_operands = 0 : i64, tpu.core_type = #tpu.core_type<tc>, window_params = [{transform_indices = @transform_0, window_bounds = array<i64: 16, 32>}, {pipeline_mode = #tpu.pipeline_mode<synchronous>, transform_indices = @transform_1, window_bounds = array<i64: 32, 128>}, {pipeline_mode = #tpu.pipeline_mode<synchronous>, transform_indices = @transform_2, window_bounds = array<i64: 1, 128>}, {pipeline_mode = #tpu.pipeline_mode<synchronous>, transform_indices = @transform_3, window_bounds = array<i64: 128, 32>}, {pipeline_mode = #tpu.pipeline_mode<synchronous>, transform_indices = @transform_4, window_bounds = array<i64: 1, 32>}, {pipeline_mode = #tpu.pipeline_mode<synchronous>, transform_indices = @transform_5, window_bounds = array<i64: 1, 32>}, {pipeline_mode = #tpu.pipeline_mode<synchronous>, transform_indices = @transform_6, window_bounds = array<i64: 1, 32>}, {transform_indices = @transform_7, window_bounds = array<i64: 16, 32>}]} {
    %c0 = arith.constant 0 : index
    %c0_0 = arith.constant 0 : index
    %0 = vector.load %arg1[%c0, %c0_0] : memref<16x32xf32, #tpu.memory_space<vmem>>, vector<16x32xf32>
    %1 = arith.truncf %0 : vector<16x32xf32> to vector<16x32xbf16>
    %c0_1 = arith.constant 0 : index
    %c0_2 = arith.constant 0 : index
    %2 = vector.load %arg2[%c0_1, %c0_2] : memref<32x128xbf16, #tpu.memory_space<vmem>>, vector<32x128xbf16>
    %cst = arith.constant dense<0.000000e+00> : vector<16x128xf32>
    %3 = tpu.matmul %1, %2, %cst {dimension_numbers = #tpu.dot_dimension_numbers<[1], [0], [0], [1], [0, 0, 1, 1], [], []>} : vector<16x32xbf16>, vector<32x128xbf16>, vector<16x128xf32> -> vector<16x128xf32>
    %c0_3 = arith.constant 0 : index
    %c0_4 = arith.constant 0 : index
    %4 = vector.load %arg3[%c0_3, %c0_4] : memref<1x128xf32, #tpu.memory_space<vmem>>, vector<1x128xf32>
    %5 = vector.broadcast %4 : vector<1x128xf32> to vector<16x128xf32>
    %6 = arith.addf %3, %5 : vector<16x128xf32>
    %cst_5 = arith.constant 0.000000e+00 : f32
    %7 = vector.broadcast %cst_5 : f32 to vector<16x128xf32>
    %8 = arith.maximumf %6, %7 : vector<16x128xf32>
    %9 = arith.truncf %8 : vector<16x128xf32> to vector<16x128xbf16>
    %c0_6 = arith.constant 0 : index
    %c0_7 = arith.constant 0 : index
    %10 = vector.load %arg4[%c0_6, %c0_7] : memref<128x32xbf16, #tpu.memory_space<vmem>>, vector<128x32xbf16>
    %cst_8 = arith.constant dense<0.000000e+00> : vector<16x32xf32>
    %11 = tpu.matmul %9, %10, %cst_8 {dimension_numbers = #tpu.dot_dimension_numbers<[1], [0], [0], [1], [0, 0, 1, 1], [], []>} : vector<16x128xbf16>, vector<128x32xbf16>, vector<16x32xf32> -> vector<16x32xf32>
    %c0_9 = arith.constant 0 : index
    %c0_10 = arith.constant 0 : index
    %12 = vector.load %arg5[%c0_9, %c0_10] : memref<1x32xf32, #tpu.memory_space<vmem>>, vector<1x32xf32>
    %13 = vector.broadcast %12 : vector<1x32xf32> to vector<16x32xf32>
    %14 = arith.addf %11, %13 : vector<16x32xf32>
    %15 = arith.addf %0, %14 : vector<16x32xf32>
    %cst_11 = arith.constant dense<0.000000e+00> : vector<16xf32>
    %16 = vector.multi_reduction <add>, %15, %cst_11 [1] : vector<16x32xf32> to vector<16xf32>
    %17 = vector.shape_cast %16 : vector<16xf32> to vector<16x1xf32>
    %cst_12 = arith.constant 3.200000e+01 : f32
    %18 = vector.broadcast %cst_12 : f32 to vector<16x1xf32>
    %19 = arith.divf %17, %18 : vector<16x1xf32>
    %20 = vector.broadcast %19 : vector<16x1xf32> to vector<16x32xf32>
    %21 = arith.subf %15, %20 : vector<16x32xf32>
    %22 = arith.mulf %21, %21 : vector<16x32xf32>
    %cst_13 = arith.constant dense<0.000000e+00> : vector<16xf32>
    %23 = vector.multi_reduction <add>, %22, %cst_13 [1] : vector<16x32xf32> to vector<16xf32>
    %24 = vector.shape_cast %23 : vector<16xf32> to vector<16x1xf32>
    %cst_14 = arith.constant 3.200000e+01 : f32
    %25 = vector.broadcast %cst_14 : f32 to vector<16x1xf32>
    %26 = arith.divf %24, %25 : vector<16x1xf32>
    %27 = vector.broadcast %19 : vector<16x1xf32> to vector<16x32xf32>
    %28 = arith.subf %15, %27 : vector<16x32xf32>
    %cst_15 = arith.constant 9.99999974E-6 : f32
    %29 = vector.broadcast %cst_15 : f32 to vector<16x1xf32>
    %30 = arith.addf %26, %29 : vector<16x1xf32>
    %31 = math.rsqrt %30 : vector<16x1xf32>
    %32 = vector.broadcast %31 : vector<16x1xf32> to vector<16x32xf32>
    %33 = arith.mulf %28, %32 : vector<16x32xf32>
    %c0_16 = arith.constant 0 : index
    %c0_17 = arith.constant 0 : index
    %34 = vector.load %arg6[%c0_16, %c0_17] : memref<1x32xf32, #tpu.memory_space<vmem>>, vector<1x32xf32>
    %35 = vector.broadcast %34 : vector<1x32xf32> to vector<16x32xf32>
    %36 = arith.mulf %33, %35 : vector<16x32xf32>
    %c0_18 = arith.constant 0 : index
    %c0_19 = arith.constant 0 : index
    %37 = vector.load %arg7[%c0_18, %c0_19] : memref<1x32xf32, #tpu.memory_space<vmem>>, vector<1x32xf32>
    %38 = vector.broadcast %37 : vector<1x32xf32> to vector<16x32xf32>
    %39 = arith.addf %36, %38 : vector<16x32xf32>
    %c0_20 = arith.constant 0 : index
    %c0_21 = arith.constant 0 : index
    %40 = vector.load %arg8[%c0_20, %c0_21] : memref<16x32xf32, #tpu.memory_space<vmem>>, vector<16x32xf32>
    tpu.vector_store %arg8[%c0_20, %c0_21], %39 {strides = array<i32>} : memref<16x32xf32, #tpu.memory_space<vmem>>, vector<16x32xf32>,
    return
  }
  func.func @transform_0(%arg0: i32) -> (i32, i32) {
    %c0_i32 = arith.constant 0 : i32
    %c0_i32_0 = arith.constant 0 : i32
    return %arg0, %c0_i32 : i32, i32
  }
  func.func @transform_1(%arg0: i32) -> (i32, i32) {
    %c0_i32 = arith.constant 0 : i32
    %c0_i32_0 = arith.constant 0 : i32
    %c0_i32_1 = arith.constant 0 : i32
    return %c0_i32, %c0_i32_0 : i32, i32
  }
  func.func @transform_2(%arg0: i32) -> (i32, i32) {
    %c0_i32 = arith.constant 0 : i32
    %c0_i32_0 = arith.constant 0 : i32
    %c0_i32_1 = arith.constant 0 : i32
    return %c0_i32, %c0_i32_0 : i32, i32
  }
  func.func @transform_3(%arg0: i32) -> (i32, i32) {
    %c0_i32 = arith.constant 0 : i32
    %c0_i32_0 = arith.constant 0 : i32
    %c0_i32_1 = arith.constant 0 : i32
    return %c0_i32, %c0_i32_0 : i32, i32
  }
  func.func @transform_4(%arg0: i32) -> (i32, i32) {
    %c0_i32 = arith.constant 0 : i32
    %c0_i32_0 = arith.constant 0 : i32
    %c0_i32_1 = arith.constant 0 : i32
    return %c0_i32, %c0_i32_0 : i32, i32
  }
  func.func @transform_5(%arg0: i32) -> (i32, i32) {
    %c0_i32 = arith.constant 0 : i32
    %c0_i32_0 = arith.constant 0 : i32
    %c0_i32_1 = arith.constant 0 : i32
    return %c0_i32, %c0_i32_0 : i32, i32
  }
  func.func @transform_6(%arg0: i32) -> (i32, i32) {
    %c0_i32 = arith.constant 0 : i32
    %c0_i32_0 = arith.constant 0 : i32
    %c0_i32_1 = arith.constant 0 : i32
    return %c0_i32, %c0_i32_0 : i32, i32
  }
  func.func @transform_7(%arg0: i32) -> (i32, i32) {
    %c0_i32 = arith.constant 0 : i32
    %c0_i32_0 = arith.constant 0 : i32
    return %arg0, %c0_i32 : i32, i32
  }
}

</mosaic_0001>

<llo_original>
// kernel: transformer_audio_encoder.5
$region0: #{transformer_audio_encoder.5}
  #allocation0 [shape = 'u32[]', space=smem, size = 0x4, offset = 0x4, fixed_abs, tag = 'smem constant byte address 0x4 - core index']
  #allocation1 [shape = 'u32[144,128]{1,0:T(1,128)}', space=vmem, size = 0x12000, scoped, tag = 'internal scratch']
  %s0 = inlined_call_operand.vmem [shape: f32[16,16], index: 0, kind: input, shape index: {}]
  %s1 = inlined_call_operand.vmem [shape: bf16[16,32], index: 1, kind: input, shape index: {}]
  %s2 = inlined_call_operand.vmem [shape: f32[1,32], index: 2, kind: input, shape index: {}]
  %s3 = inlined_call_operand.vmem [shape: f32[16,32], index: 3, kind: output, shape index: {}]
  %s4 = sld [smem:[#allocation0]]
  $region22: #{transformer_audio_encoder.5} parent=0
    _
  %s6 = ssub.s32 1, %s4
  %s7 = scalar_select 0, %s6, %s4
  // Predicated region
  $region2: #{transformer_audio_encoder.5} parent=0 // pred_check
    _
  $region3: #{transformer_audio_encoder.5} parent=0 // pred_check_branch
    %9 = sbr.rel (0) target = $region5
  $region4: #{transformer_audio_encoder.5} parent=0 // pred_region
    _
  $region5: #{transformer_audio_encoder.5} parent=0 // pred_fallthru
    _
  // Predicated region
  $region6: #{transformer_audio_encoder.5} parent=0 // pred_check
    _
  $region7: #{transformer_audio_encoder.5} parent=0 // pred_check_branch
    %11 = sbr.rel (0) target = $region9
  $region8: #{transformer_audio_encoder.5} parent=0 // pred_region
    _
  $region9: #{transformer_audio_encoder.5} parent=0 // pred_fallthru
    _
  // Predicated region
  $region10: #{transformer_audio_encoder.5} parent=0 // pred_check
    _
  $region11: #{transformer_audio_encoder.5} parent=0 // pred_check_branch
    %13 = sbr.rel (0) target = $region13
  $region12: #{transformer_audio_encoder.5} parent=0 // pred_region
    _
  $region13: #{transformer_audio_encoder.5} parent=0 // pred_fallthru
    _
  %v15 = vld [vmem:[%s0] sm:$0xff]
  %v16 = vld [vmem:[%s0 + $0x8] sm:$0xff]
  %v17 = vpack.c.bf16 %v16, %v15
  %v18 = vld [vmem:[%s1] sm:$0xf]
  %v19 = vld [vmem:[%s1 + $0x4] sm:$0xf]
  %v20 = vld [vmem:[%s2] sm:$0x1]
  %v22 = vlaneseq
  %v23 = vshrl.u32 %v22, 7
  %v24 = vsub.s32 0, %v23
  %v25 = vrot.slane %v20, %v24
  %v29 = vunpack.c.l.b16 %v18
  %v30 = vunpack.c.l.b16 %v19
  %v31 = vpack.c.b16 %v30, %v29
  %vm33 = vcmask 130048
  %v35 = vsel %vm33, %v17, 0
  %37 = vmatprep.subr.bf16.mxu0 0
  %38 = vmatpush1.bf16.msra.mxu0 %v31
  %39 = vmatprep.subr.bf16.mxu0 0
  %40 = vmatpush1.bf16.msra.mxu0 0
  %41 = vmatprep.subr.bf16.mxu0 0
  %42 = vmatpush1.bf16.msra.mxu0 0
  %43 = vmatprep.subr.bf16.mxu0 0
  %44 = vmatpush1.bf16.msra.mxu0 0
  %45 = vmatprep.subr.bf16.mxu0 0
  %46 = vmatpush1.bf16.msra.mxu0 0
  %47 = vmatprep.subr.bf16.mxu0 0
  %48 = vmatpush1.bf16.msra.mxu0 0
  %49 = vmatprep.subr.bf16.mxu0 0
  %50 = vmatpush1.bf16.msra.mxu0 0
  %51 = vmatprep.subr.bf16.mxu0 0
  %52 = vmatpush1.bf16.msra.mxu0 0
  %53 = vmatprep.subr.bf16.mxu0 0
  %54 = vmatpush1.bf16.msra.mxu0 0
  %55 = vmatprep.subr.bf16.mxu0 0
  %56 = vmatpush1.bf16.msra.mxu0 0
  %57 = vmatprep.subr.bf16.mxu0 0
  %58 = vmatpush1.bf16.msra.mxu0 0
  %59 = vmatprep.subr.bf16.mxu0 0
  %60 = vmatpush1.bf16.msra.mxu0 0
  %61 = vmatprep.subr.bf16.mxu0 0
  %62 = vmatpush1.bf16.msra.mxu0 0
  %63 = vmatprep.subr.bf16.mxu0 0
  %64 = vmatpush1.bf16.msra.mxu0 0
  %65 = vmatprep.subr.bf16.mxu0 0
  %66 = vmatpush1.bf16.msra.mxu0 0
  %67 = vmatprep.subr.bf16.mxu0 0
  %68 = vmatpush1.bf16.msra.mxu0 0
  %69 = vmatprep.mubr.bf16.mxu0 0
  %70 = vmatmul.mubr.bf16.gmra.mrb[0].mxu0 %v35
  %v71 = vpop.f32.mrb[0].mxu0
  %v72 = vadd.f32 %v25, %v71
  %v73 = vpop.f32.mrb[0].mxu0
  %v74 = vpop.f32.mrb[0].mxu0
  %v75 = vadd.f32 %v25, %v74
  %v76 = vpop.f32.mrb[0].mxu0
  %77 = vdwg.mxu0
  %vm78 = vcmask 261120
  %79 = vst.msk [vmem:[%s3] sm:$0xff] %vm78, %v72
  %80 = vst.msk [vmem:[%s3 + $0x8] sm:$0xff] %vm78, %v75
  // Predicated region
  $region14: #{transformer_audio_encoder.5} parent=0 // pred_check
    _
  $region15: #{transformer_audio_encoder.5} parent=0 // pred_check_branch
    %82 = sbr.rel (0) target = $region17
  $region16: #{transformer_audio_encoder.5} parent=0 // pred_region
    _
  $region17: #{transformer_audio_encoder.5} parent=0 // pred_fallthru
    _
  // Predicated region
  $region18: #{transformer_audio_encoder.5} parent=0 // pred_check
    _
  $region19: #{transformer_audio_encoder.5} parent=0 // pred_check_branch
    %84 = sbr.rel (0) target = $region21
  $region20: #{transformer_audio_encoder.5} parent=0 // pred_region
    _
  $region21: #{transformer_audio_encoder.5} parent=0 // pred_fallthru
    _

// kernel: transformer_audio_encoder.7
$region0: #{transformer_audio_encoder.7}
  #allocation0 [shape = 'u32[]', space=smem, size = 0x4, offset = 0x4, fixed_abs, tag = 'smem constant byte address 0x4 - core index']
  #allocation1 [shape = 'u32[144,128]{1,0:T(1,128)}', space=vmem, size = 0x12000, scoped, tag = 'internal scratch']
  %s0 = inlined_call_operand.vmem [shape: f32[16,32], index: 0, kind: input, shape index: {}]
  %s1 = inlined_call_operand.vmem [shape: bf16[32,128], index: 1, kind: input, shape index: {}]
  %s2 = inlined_call_operand.vmem [shape: f32[1,128], index: 2, kind: input, shape index: {}]
  %s3 = inlined_call_operand.vmem [shape: bf16[128,32], index: 3, kind: input, shape index: {}]
  %s4 = inlined_call_operand.vmem [shape: f32[1,32], index: 4, kind: input, shape index: {}]
  %s5 = inlined_call_operand.vmem [shape: f32[1,32], index: 5, kind: input, shape index: {}]
  %s6 = inlined_call_operand.vmem [shape: f32[1,32], index: 6, kind: input, shape index: {}]
  %s7 = inlined_call_operand.vmem [shape: f32[16,32], index: 7, kind: output, shape index: {}]
  %s8 = sld [smem:[#allocation0]]
  $region38: #{transformer_audio_encoder.7} parent=0
    _
  %s10 = ssub.s32 1, %s8
  %s11 = scalar_select 0, %s10, %s8
  // Predicated region
  $region2: #{transformer_audio_encoder.7} parent=0 // pred_check
    _
  $region3: #{transformer_audio_encoder.7} parent=0 // pred_check_branch
    %13 = sbr.rel (0) target = $region5
  $region4: #{transformer_audio_encoder.7} parent=0 // pred_region
    _
  $region5: #{transformer_audio_encoder.7} parent=0 // pred_fallthru
    _
  // Predicated region
  $region6: #{transformer_audio_encoder.7} parent=0 // pred_check
    _
  $region7: #{transformer_audio_encoder.7} parent=0 // pred_check_branch
    %15 = sbr.rel (0) target = $region9
  $region8: #{transformer_audio_encoder.7} parent=0 // pred_region
    _
  $region9: #{transformer_audio_encoder.7} parent=0 // pred_fallthru
    _
  // Predicated region
  $region10: #{transformer_audio_encoder.7} parent=0 // pred_check
    _
  $region11: #{transformer_audio_encoder.7} parent=0 // pred_check_branch
    %17 = sbr.rel (0) target = $region13
  $region12: #{transformer_audio_encoder.7} parent=0 // pred_region
    _
  $region13: #{transformer_audio_encoder.7} parent=0 // pred_fallthru
    _
  // Predicated region
  $region14: #{transformer_audio_encoder.7} parent=0 // pred_check
    _
  $region15: #{transformer_audio_encoder.7} parent=0 // pred_check_branch
    %19 = sbr.rel (0) target = $region17
  $region16: #{transformer_audio_encoder.7} parent=0 // pred_region
    _
  $region17: #{transformer_audio_encoder.7} parent=0 // pred_fallthru
    _
  // Predicated region
  $region18: #{transformer_audio_encoder.7} parent=0 // pred_check
    _
  $region19: #{transformer_audio_encoder.7} parent=0 // pred_check_branch
    %21 = sbr.rel (0) target = $region21
  $region20: #{transformer_audio_encoder.7} parent=0 // pred_region
    _
  $region21: #{transformer_audio_encoder.7} parent=0 // pred_fallthru
    _
  // Predicated region
  $region22: #{transformer_audio_encoder.7} parent=0 // pred_check
    _
  $region23: #{transformer_audio_encoder.7} parent=0 // pred_check_branch
    %23 = sbr.rel (0) target = $region25
  $region24: #{transformer_audio_encoder.7} parent=0 // pred_region
    _
  $region25: #{transformer_audio_encoder.7} parent=0 // pred_fallthru
    _
  // Predicated region
  $region26: #{transformer_audio_encoder.7} parent=0 // pred_check
    _
  $region27: #{transformer_audio_encoder.7} parent=0 // pred_check_branch
    %25 = sbr.rel (0) target = $region29
  $region28: #{transformer_audio_encoder.7} parent=0 // pred_region
    _
  $region29: #{transformer_audio_encoder.7} parent=0 // pred_fallthru
    _
  %v27 = vld [vmem:[%s0] sm:$0xff]
  %v28 = vld [vmem:[%s0 + $0x8] sm:$0xff]
  %v29 = vpack.c.bf16 %v28, %v27
  %v30 = vld [vmem:[%s1] sm:$0xf]
  %v31 = vld [vmem:[%s1 + $0x4] sm:$0xf]
  %v32 = vld [vmem:[%s1 + $0x8] sm:$0xf]
  %v33 = vld [vmem:[%s1 + $0xc] sm:$0xf]
  %v34 = vld [vmem:[%s2] sm:$0x1]
  %v36 = vlaneseq
  %v37 = vshrl.u32 %v36, 7
  %v38 = vsub.s32 0, %v37
  %v39 = vrot.slane %v34, %v38
  %v45 = vunpack.c.l.b16 %v30
  %v46 = vunpack.c.l.b16 %v31
  %v47 = vunpack.c.l.b16 %v32
  %v48 = vunpack.c.l.b16 %v33
  %v49 = vpack.c.b16 %v46, %v45
  %v50 = vpack.c.b16 %v48, %v47
  %vm53 = vcmask 261120
  %v55 = vsel %vm53, %v29, 0
  %57 = vmatprep.subr.bf16.mxu0 0
  %58 = vmatpush1.bf16.msra.mxu0 %v49
  %59 = vmatprep.subr.bf16.mxu0 0
  %60 = vmatpush1.bf16.msra.mxu0 %v50
  %61 = vmatprep.subr.bf16.mxu0 0
  %62 = vmatpush1.bf16.msra.mxu0 0
  %63 = vmatprep.subr.bf16.mxu0 0
  %64 = vmatpush1.bf16.msra.mxu0 0
  %65 = vmatprep.subr.bf16.mxu0 0
  %66 = vmatpush1.bf16.msra.mxu0 0
  %67 = vmatprep.subr.bf16.mxu0 0
  %68 = vmatpush1.bf16.msra.mxu0 0
  %69 = vmatprep.subr.bf16.mxu0 0
  %70 = vmatpush1.bf16.msra.mxu0 0
  %71 = vmatprep.subr.bf16.mxu0 0
  %72 = vmatpush1.bf16.msra.mxu0 0
  %73 = vmatprep.subr.bf16.mxu0 0
  %74 = vmatpush1.bf16.msra.mxu0 0
  %75 = vmatprep.subr.bf16.mxu0 0
  %76 = vmatpush1.bf16.msra.mxu0 0
  %77 = vmatprep.subr.bf16.mxu0 0
  %78 = vmatpush1.bf16.msra.mxu0 0
  %79 = vmatprep.subr.bf16.mxu0 0
  %80 = vmatpush1.bf16.msra.mxu0 0
  %81 = vmatprep.subr.bf16.mxu0 0
  %82 = vmatpush1.bf16.msra.mxu0 0
  %83 = vmatprep.subr.bf16.mxu0 0
  %84 = vmatpush1.bf16.msra.mxu0 0
  %85 = vmatprep.subr.bf16.mxu0 0
  %86 = vmatpush1.bf16.msra.mxu0 0
  %87 = vmatprep.subr.bf16.mxu0 0
  %88 = vmatpush1.bf16.msra.mxu0 0
  %89 = vmatprep.mubr.bf16.mxu0 0
  %90 = vmatmul.mubr.bf16.gmra.mrb[0].mxu0 %v55
  %v91 = vpop.f32.mrb[0].mxu0
  %v92 = vadd.f32 %v39, %v91
  %v93 = vpop.f32.mrb[0].mxu0
  %v94 = vpop.f32.mrb[0].mxu0
  %v95 = vadd.f32 %v39, %v94
  %v96 = vpop.f32.mrb[0].mxu0
  %97 = vdwg.mxu0
  %v98 = vmax.f32 %v92, 0.0
  %v99 = vmax.f32 %v95, 0.0
  %v100 = vpack.c.bf16 %v99, %v98
  %v101 = vld [vmem:[%s3] sm:$0xf]
  %v102 = vld [vmem:[%s3 + $0x4] sm:$0xf]
  %v103 = vld [vmem:[%s3 + $0x8] sm:$0xf]
  %v104 = vld [vmem:[%s3 + $0xc] sm:$0xf]
  %v105 = vld [vmem:[%s3 + $0x10] sm:$0xf]
  %v106 = vld [vmem:[%s3 + $0x14] sm:$0xf]
  %v107 = vld [vmem:[%s3 + $0x18] sm:$0xf]
  %v108 = vld [vmem:[%s3 + $0x1c] sm:$0xf]
  %v109 = vld [vmem:[%s3 + $0x20] sm:$0xf]
  %v110 = vld [vmem:[%s3 + $0x24] sm:$0xf]
  %v111 = vld [vmem:[%s3 + $0x28] sm:$0xf]
  %v112 = vld [vmem:[%s3 + $0x2c] sm:$0xf]
  %v113 = vld [vmem:[%s3 + $0x30] sm:$0xf]
  %v114 = vld [vmem:[%s3 + $0x34] sm:$0xf]
  %v115 = vld [vmem:[%s3 + $0x38] sm:$0xf]
  %v116 = vld [vmem:[%s3 + $0x3c] sm:$0xf]
  %v117 = vld [vmem:[%s4] sm:$0x1]
  %v119 = vlaneseq
  %v120 = vshrl.u32 %v119, 7
  %v121 = vsub.s32 0, %v120
  %v122 = vrot.slane %v117, %v121
  %v140 = vunpack.c.l.b16 %v101
  %v141 = vunpack.c.l.b16 %v102
  %v142 = vunpack.c.l.b16 %v103
  %v143 = vunpack.c.l.b16 %v104
  %v144 = vunpack.c.l.b16 %v105
  %v145 = vunpack.c.l.b16 %v106
  %v146 = vunpack.c.l.b16 %v107
  %v147 = vunpack.c.l.b16 %v108
  %v148 = vunpack.c.l.b16 %v109
  %v149 = vunpack.c.l.b16 %v110
  %v150 = vunpack.c.l.b16 %v111
  %v151 = vunpack.c.l.b16 %v112
  %v152 = vunpack.c.l.b16 %v113
  %v153 = vunpack.c.l.b16 %v114
  %v154 = vunpack.c.l.b16 %v115
  %v155 = vunpack.c.l.b16 %v116
  %v156 = vpack.c.b16 %v141, %v140
  %v157 = vpack.c.b16 %v143, %v142
  %v158 = vpack.c.b16 %v145, %v144
  %v159 = vpack.c.b16 %v147, %v146
  %v160 = vpack.c.b16 %v149, %v148
  %v161 = vpack.c.b16 %v151, %v150
  %v162 = vpack.c.b16 %v153, %v152
  %v163 = vpack.c.b16 %v155, %v154
  %172 = vmatprep.subr.bf16.mxu0 0
  %173 = vmatpush1.bf16.msra.mxu0 %v156
  %174 = vmatprep.subr.bf16.mxu0 0
  %175 = vmatpush1.bf16.msra.mxu0 %v157
  %176 = vmatprep.subr.bf16.mxu0 0
  %177 = vmatpush1.bf16.msra.mxu0 %v158
  %178 = vmatprep.subr.bf16.mxu0 0
  %179 = vmatpush1.bf16.msra.mxu0 %v159
  %180 = vmatprep.subr.bf16.mxu0 0
  %181 = vmatpush1.bf16.msra.mxu0 %v160
  %182 = vmatprep.subr.bf16.mxu0 0
  %183 = vmatpush1.bf16.msra.mxu0 %v161
  %184 = vmatprep.subr.bf16.mxu0 0
  %185 = vmatpush1.bf16.msra.mxu0 %v162
  %186 = vmatprep.subr.bf16.mxu0 0
  %187 = vmatpush1.bf16.msra.mxu0 %v163
  %188 = vmatprep.subr.bf16.mxu0 0
  %189 = vmatpush1.bf16.msra.mxu0 0
  %190 = vmatprep.subr.bf16.mxu0 0
  %191 = vmatpush1.bf16.msra.mxu0 0
  %192 = vmatprep.subr.bf16.mxu0 0
  %193 = vmatpush1.bf16.msra.mxu0 0
  %194 = vmatprep.subr.bf16.mxu0 0
  %195 = vmatpush1.bf16.msra.mxu0 0
  %196 = vmatprep.subr.bf16.mxu0 0
  %197 = vmatpush1.bf16.msra.mxu0 0
  %198 = vmatprep.subr.bf16.mxu0 0
  %199 = vmatpush1.bf16.msra.mxu0 0
  %200 = vmatprep.subr.bf16.mxu0 0
  %201 = vmatpush1.bf16.msra.mxu0 0
  %202 = vmatprep.subr.bf16.mxu0 0
  %203 = vmatpush1.bf16.msra.mxu0 0
  %204 = vmatprep.mubr.bf16.mxu0 0
  %205 = vmatmul.mubr.bf16.gmra.mrb[0].mxu0 %v100
  %v206 = vpop.f32.mrb[0].mxu0
  %v207 = vadd.f32 %v122, %v206
  %v208 = vpop.f32.mrb[0].mxu0
  %v209 = vpop.f32.mrb[0].mxu0
  %v210 = vadd.f32 %v122, %v209
  %v211 = vpop.f32.mrb[0].mxu0
  %212 = vdwg.mxu0
  %v213 = vadd.f32 %v27, %v207
  %v214 = vadd.f32 %v28, %v210
  %v215 = vsel %vm53, %v213, 0.0
  %216 = vadd.xlane.f32.xlu0 %v215
  %v217 = vpop.xlane.xlu0 %216
  %v218 = vsel %vm53, %v214, 0.0
  %219 = vadd.xlane.f32.xlu0 %v218
  %v220 = vpop.xlane.xlu0 %219
  %v221 = vrcp.pop 32.0
  %v222 = vmul.f32 %v217, %v221
  %v223 = vmul.f32 %v220, %v221
  %v224 = vsub.f32 %v213, %v222
  %v225 = vsub.f32 %v214, %v223
  %v226 = vmul.f32 %v224, %v224
  %v227 = vmul.f32 %v225, %v225
  %v228 = vsel %vm53, %v226, 0.0
  %229 = vadd.xlane.f32.xlu0 %v228
  %v230 = vpop.xlane.xlu0 %229
  %v231 = vsel %vm53, %v227, 0.0
  %232 = vadd.xlane.f32.xlu0 %v231
  %v233 = vpop.xlane.xlu0 %232
  %v234 = vmul.f32 %v230, %v221
  %v235 = vmul.f32 %v233, %v221
  %v236 = vadd.f32 %v234, 1e-05
  %v237 = vadd.f32 %v235, 1e-05
  %v238 = vrsqrt.pop %v236
  %v239 = vrsqrt.pop %v237
  %v240 = vmul.f32 %v224, %v238
  %v241 = vmul.f32 %v225, %v239
  %v242 = vld [vmem:[%s5] sm:$0x1]
  %v244 = vlaneseq
  %v245 = vshrl.u32 %v244, 7
  %v246 = vsub.s32 0, %v245
  %v247 = vrot.slane %v242, %v246
  %v249 = vmul.f32 %v240, %v247
  %v250 = vmul.f32 %v241, %v247
  %v251 = vld [vmem:[%s6] sm:$0x1]
  %v253 = vlaneseq
  %v254 = vshrl.u32 %v253, 7
  %v255 = vsub.s32 0, %v254
  %v256 = vrot.slane %v251, %v255
  %v258 = vadd.f32 %v249, %v256
  %v259 = vadd.f32 %v250, %v256
  %260 = vst.msk [vmem:[%s7] sm:$0xff] %vm53, %v258
  %261 = vst.msk [vmem:[%s7 + $0x8] sm:$0xff] %vm53, %v259
  // Predicated region
  $region30: #{transformer_audio_encoder.7} parent=0 // pred_check
    _
  $region31: #{transformer_audio_encoder.7} parent=0 // pred_check_branch
    %263 = sbr.rel (0) target = $region33
  $region32: #{transformer_audio_encoder.7} parent=0 // pred_region
    _
  $region33: #{transformer_audio_encoder.7} parent=0 // pred_fallthru
    _
  // Predicated region
  $region34: #{transformer_audio_encoder.7} parent=0 // pred_check
    _
  $region35: #{transformer_audio_encoder.7} parent=0 // pred_check_branch
    %265 = sbr.rel (0) target = $region37
  $region36: #{transformer_audio_encoder.7} parent=0 // pred_region
    _
  $region37: #{transformer_audio_encoder.7} parent=0 // pred_fallthru
    _

// kernel: transformer_audio_encoder.6
$region0: #{transformer_audio_encoder.6}
  #allocation0 [shape = 'u32[]', space=smem, size = 0x4, offset = 0x4, fixed_abs, tag = 'smem constant byte address 0x4 - core index']
  #allocation1 [shape = 'u32[144,128]{1,0:T(1,128)}', space=vmem, size = 0x12000, scoped, tag = 'internal scratch']
  %s0 = inlined_call_operand.vmem [shape: f32[2,8,32], index: 0, kind: input, shape index: {}]
  %s1 = inlined_call_operand.vmem [shape: bf16[32,96], index: 1, kind: input, shape index: {}]
  %s2 = inlined_call_operand.vmem [shape: f32[1,96], index: 2, kind: input, shape index: {}]
  %s3 = inlined_call_operand.vmem [shape: bf16[32,32], index: 3, kind: input, shape index: {}]
  %s4 = inlined_call_operand.vmem [shape: f32[1,32], index: 4, kind: input, shape index: {}]
  %s5 = inlined_call_operand.vmem [shape: f32[1,32], index: 5, kind: input, shape index: {}]
  %s6 = inlined_call_operand.vmem [shape: f32[1,32], index: 6, kind: input, shape index: {}]
  %s7 = inlined_call_operand.vmem [shape: f32[2,8,32], index: 7, kind: output, shape index: {}]
  %s8 = sld [smem:[#allocation0]]
  $region61: #{transformer_audio_encoder.6} parent=0
    _
  %s10 = ssub.s32 1, %s8
  %s11 = scalar_select 0, %s10, %s8
  loop: start=0, step=1, limit=4
  $region2: #{transformer_audio_encoder.6} parent=0 // loop_pre_header
    _
  $region3: #{transformer_audio_encoder.6} parent=0 // loop_header
    %s13 = sphi 0, %s17
    %p14 = scmp.ge.s32.totalorder %s13, 4
    %s23 = sphi 0, %s25
    %s26 = sphi 0, %s23
    %s27 = sphi 0, %s26
    %s43 = sphi 0, %s27
    %s47 = sphi 0, %s47
    %s49 = sphi 0, %s47
    %s50 = sphi 0, %s49
    %s64 = sphi 0, %s50
    %s68 = sphi 0, %s68
    %s70 = sphi 0, %s68
    %s71 = sphi 0, %s70
    %s85 = sphi 0, %s71
    %s89 = sphi 0, %s89
    %s91 = sphi 0, %s89
    %s92 = sphi 0, %s91
    %s106 = sphi 0, %s92
    %s110 = sphi 0, %s110
    %s112 = sphi 0, %s110
    %s113 = sphi 0, %s112
    %s127 = sphi 0, %s113
    %s131 = sphi 0, %s131
    %s133 = sphi 0, %s131
    %s134 = sphi 0, %s133
    %s148 = sphi 0, %s134
    %s152 = sphi 0, %s152
    %s154 = sphi 0, %s152
    %s155 = sphi 0, %s154
    %s169 = sphi 0, %s155
    %s175 = sphi 0, %s177
    %s178 = sphi 0, %s175
    %s179 = sphi 0, %s178
    %s195 = sphi 0, %s179
  $region4: #{transformer_audio_encoder.6} parent=0 // loop_header_branch
    %16 = sbr.rel (%p14) target = $region8
  $region5: #{transformer_audio_encoder.6} parent=0 // loop_body
    %s18 = ssub.s32 %s13, 1
    %s19 = ssub.s32 %s13, 2
    %s20 = sadd.s32 %s13, 1
    %s21 = ssub.s32 %s13, %s20
    %p22 = scmp.eq.s32.totalorder %s21, 0
    %s24 = sadd.s32 %s23, 1
    %s25 = scalar_select %p22, %s23, %s24
    %p28 = pneg %p22
    %p29 = scmp.eq.s32.totalorder %s13, 1
    %p30 = por %p28, %p29
    %p31 = scmp.ne.s32.totalorder %s23, %s26
    %p32 = scmp.eq.s32.totalorder %s13, 0
    %p33 = por %p31, %p32
    %p34 = scmp.ne.s32.totalorder %s23, %s26
    %p35 = scmp.eq.s32.totalorder %s18, 1
    %p36 = por %p34, %p35
    %p37 = scmp.ne.s32.totalorder %s26, %s27
    %p38 = scmp.eq.s32.totalorder %s18, 0
    %p39 = por %p37, %p38
    %p40 = scmp.ne.s32.totalorder %s26, %s27
    %p41 = scmp.eq.s32.totalorder %s19, 1
    %p42 = por %p40, %p41
    %p44 = scmp.ne.s32.totalorder %s27, %s43
    %p45 = scmp.eq.s32.totalorder %s19, 0
    %p46 = por %p44, %p45
    %s48 = sadd.s32 %s47, 1
    %p51 = scmp.eq.s32.totalorder %s13, 1
    %p52 = scmp.ne.s32.totalorder %s47, %s49
    %p53 = scmp.eq.s32.totalorder %s13, 0
    %p54 = por %p52, %p53
    %p55 = scmp.ne.s32.totalorder %s47, %s49
    %p56 = scmp.eq.s32.totalorder %s18, 1
    %p57 = por %p55, %p56
    %p58 = scmp.ne.s32.totalorder %s49, %s50
    %p59 = scmp.eq.s32.totalorder %s18, 0
    %p60 = por %p58, %p59
    %p61 = scmp.ne.s32.totalorder %s49, %s50
    %p62 = scmp.eq.s32.totalorder %s19, 1
    %p63 = por %p61, %p62
    %p65 = scmp.ne.s32.totalorder %s50, %s64
    %p66 = scmp.eq.s32.totalorder %s19, 0
    %p67 = por %p65, %p66
    %s69 = sadd.s32 %s68, 1
    %p72 = scmp.eq.s32.totalorder %s13, 1
    %p73 = scmp.ne.s32.totalorder %s68, %s70
    %p74 = scmp.eq.s32.totalorder %s13, 0
    %p75 = por %p73, %p74
    %p76 = scmp.ne.s32.totalorder %s68, %s70
    %p77 = scmp.eq.s32.totalorder %s18, 1
    %p78 = por %p76, %p77
    %p79 = scmp.ne.s32.totalorder %s70, %s71
    %p80 = scmp.eq.s32.totalorder %s18, 0
    %p81 = por %p79, %p80
    %p82 = scmp.ne.s32.totalorder %s70, %s71
    %p83 = scmp.eq.s32.totalorder %s19, 1
    %p84 = por %p82, %p83
    %p86 = scmp.ne.s32.totalorder %s71, %s85
    %p87 = scmp.eq.s32.totalorder %s19, 0
    %p88 = por %p86, %p87
    %s90 = sadd.s32 %s89, 1
    %p93 = scmp.eq.s32.totalorder %s13, 1
    %p94 = scmp.ne.s32.totalorder %s89, %s91
    %p95 = scmp.eq.s32.totalorder %s13, 0
    %p96 = por %p94, %p95
    %p97 = scmp.ne.s32.totalorder %s89, %s91
    %p98 = scmp.eq.s32.totalorder %s18, 1
    %p99 = por %p97, %p98
    %p100 = scmp.ne.s32.totalorder %s91, %s92
    %p101 = scmp.eq.s32.totalorder %s18, 0
    %p102 = por %p100, %p101
    %p103 = scmp.ne.s32.totalorder %s91, %s92
    %p104 = scmp.eq.s32.totalorder %s19, 1
    %p105 = por %p103, %p104
    %p107 = scmp.ne.s32.totalorder %s92, %s106
    %p108 = scmp.eq.s32.totalorder %s19, 0
    %p109 = por %p107, %p108
    %s111 = sadd.s32 %s110, 1
    %p114 = scmp.eq.s32.totalorder %s13, 1
    %p115 = scmp.ne.s32.totalorder %s110, %s112
    %p116 = scmp.eq.s32.totalorder %s13, 0
    %p117 = por %p115, %p116
    %p118 = scmp.ne.s32.totalorder %s110, %s112
    %p119 = scmp.eq.s32.totalorder %s18, 1
    %p120 = por %p118, %p119
    %p121 = scmp.ne.s32.totalorder %s112, %s113
    %p122 = scmp.eq.s32.totalorder %s18, 0
    %p123 = por %p121, %p122
    %p124 = scmp.ne.s32.totalorder %s112, %s113
    %p125 = scmp.eq.s32.totalorder %s19, 1
    %p126 = por %p124, %p125
    %p128 = scmp.ne.s32.totalorder %s113, %s127
    %p129 = scmp.eq.s32.totalorder %s19, 0
    %p130 = por %p128, %p129
    %s132 = sadd.s32 %s131, 1
    %p135 = scmp.eq.s32.totalorder %s13, 1
    %p136 = scmp.ne.s32.totalorder %s131, %s133
    %p137 = scmp.eq.s32.totalorder %s13, 0
    %p138 = por %p136, %p137
    %p139 = scmp.ne.s32.totalorder %s131, %s133
    %p140 = scmp.eq.s32.totalorder %s18, 1
    %p141 = por %p139, %p140
    %p142 = scmp.ne.s32.totalorder %s133, %s134
    %p143 = scmp.eq.s32.totalorder %s18, 0
    %p144 = por %p142, %p143
    %p145 = scmp.ne.s32.totalorder %s133, %s134
    %p146 = scmp.eq.s32.totalorder %s19, 1
    %p147 = por %p145, %p146
    %p149 = scmp.ne.s32.totalorder %s134, %s148
    %p150 = scmp.eq.s32.totalorder %s19, 0
    %p151 = por %p149, %p150
    %s153 = sadd.s32 %s152, 1
    %p156 = scmp.eq.s32.totalorder %s13, 1
    %p157 = scmp.ne.s32.totalorder %s152, %s154
    %p158 = scmp.eq.s32.totalorder %s13, 0
    %p159 = por %p157, %p158
    %p160 = scmp.ne.s32.totalorder %s152, %s154
    %p161 = scmp.eq.s32.totalorder %s18, 1
    %p162 = por %p160, %p161
    %p163 = scmp.ne.s32.totalorder %s154, %s155
    %p164 = scmp.eq.s32.totalorder %s18, 0
    %p165 = por %p163, %p164
    %p166 = scmp.ne.s32.totalorder %s154, %s155
    %p167 = scmp.eq.s32.totalorder %s19, 1
    %p168 = por %p166, %p167
    %p170 = scmp.ne.s32.totalorder %s155, %s169
    %p171 = scmp.eq.s32.totalorder %s19, 0
    %p172 = por %p170, %p171
    %s173 = ssub.s32 %s13, %s20
    %p174 = scmp.eq.s32.totalorder %s173, 0
    %s176 = sadd.s32 %s175, 1
    %s177 = scalar_select %p174, %s175, %s176
    %p180 = pneg %p174
    %p181 = scmp.eq.s32.totalorder %s13, 1
    %p182 = por %p180, %p181
    %p183 = scmp.ne.s32.totalorder %s175, %s178
    %p184 = scmp.eq.s32.totalorder %s13, 0
    %p185 = por %p183, %p184
    %p186 = scmp.ne.s32.totalorder %s175, %s178
    %p187 = scmp.eq.s32.totalorder %s18, 1
    %p188 = por %p186, %p187
    %p189 = scmp.ne.s32.totalorder %s178, %s179
    %p190 = scmp.eq.s32.totalorder %s18, 0
    %p191 = por %p189, %p190
    %p192 = scmp.ne.s32.totalorder %s178, %s179
    %p193 = scmp.eq.s32.totalorder %s19, 1
    %p194 = por %p192, %p193
    %p196 = scmp.ne.s32.totalorder %s179, %s195
    %p197 = scmp.eq.s32.totalorder %s19, 0
    %p198 = por %p196, %p197
    %p199 = scmp.le.s32.totalorder 1, %s13
    %p200 = scmp.lt.s32.totalorder %s13, 3
    %p201 = pnand %p199, %p200
    %p202 = pneg %p201
    // Predicated region
    $region9: #{transformer_audio_encoder.6} parent=5 // pred_check
      _
    $region10: #{transformer_audio_encoder.6} parent=5 // pred_check_branch
      %204 = sbr.rel (%p201) target = $region12
    $region11: #{transformer_audio_encoder.6} parent=5 // pred_region
      %s205 = ssub.s32 %s13, 1
      // Predicated region
      $region13: #{transformer_audio_encoder.6} parent=11 // pred_check
        %p206 = pneg %p60
      $region14: #{transformer_audio_encoder.6} parent=11 // pred_check_branch
        %208 = sbr.rel (%p206) target = $region16
      $region15: #{transformer_audio_encoder.6} parent=11 // pred_region
        _
      $region16: #{transformer_audio_encoder.6} parent=11 // pred_fallthru
        _
      // Predicated region
      $region17: #{transformer_audio_encoder.6} parent=11 // pred_check
        %p209 = pneg %p81
      $region18: #{transformer_audio_encoder.6} parent=11 // pred_check_branch
        %211 = sbr.rel (%p209) target = $region20
      $region19: #{transformer_audio_encoder.6} parent=11 // pred_region
        _
      $region20: #{transformer_audio_encoder.6} parent=11 // pred_fallthru
        _
      // Predicated region
      $region21: #{transformer_audio_encoder.6} parent=11 // pred_check
        %p212 = pneg %p102
      $region22: #{transformer_audio_encoder.6} parent=11 // pred_check_branch
        %214 = sbr.rel (%p212) target = $region24
      $region23: #{transformer_audio_encoder.6} parent=11 // pred_region
        _
      $region24: #{transformer_audio_encoder.6} parent=11 // pred_fallthru
        _
      // Predicated region
      $region25: #{transformer_audio_encoder.6} parent=11 // pred_check
        %p215 = pneg %p123
      $region26: #{transformer_audio_encoder.6} parent=11 // pred_check_branch
        %217 = sbr.rel (%p215) target = $region28
      $region27: #{transformer_audio_encoder.6} parent=11 // pred_region
        _
      $region28: #{transformer_audio_encoder.6} parent=11 // pred_fallthru
        _
      // Predicated region
      $region29: #{transformer_audio_encoder.6} parent=11 // pred_check
        %p218 = pneg %p144
      $region30: #{transformer_audio_encoder.6} parent=11 // pred_check_branch
        %220 = sbr.rel (%p218) target = $region32
      $region31: #{transformer_audio_encoder.6} parent=11 // pred_region
        _
      $region32: #{transformer_audio_encoder.6} parent=11 // pred_fallthru
        _
      // Predicated region
      $region33: #{transformer_audio_encoder.6} parent=11 // pred_check
        %p221 = pneg %p165
      $region34: #{transformer_audio_encoder.6} parent=11 // pred_check_branch
        %223 = sbr.rel (%p221) target = $region36
      $region35: #{transformer_audio_encoder.6} parent=11 // pred_region
        _
      $region36: #{transformer_audio_encoder.6} parent=11 // pred_fallthru
        _
    $region12: #{transformer_audio_encoder.6} parent=5 // pred_fallthru
      _
    %p224 = scmp.lt.s32.totalorder %s13, 2
    // Predicated region
    $region37: #{transformer_audio_encoder.6} parent=5 // pred_check
      %p225 = pneg %p224
    $region38: #{transformer_audio_encoder.6} parent=5 // pred_check_branch
      %227 = sbr.rel (%p225) target = $region40
    $region39: #{transformer_audio_encoder.6} parent=5 // pred_region
      // Predicated region
      $region41: #{transformer_audio_encoder.6} parent=39 // pred_check
        %p228 = pneg %p33
      $region42: #{transformer_audio_encoder.6} parent=39 // pred_check_branch
        %230 = sbr.rel (%p228) target = $region44
      $region43: #{transformer_audio_encoder.6} parent=39 // pred_region
        %p231 = scmp.lt.s32.totalorder %s13, 1
        %s232 = scalar_select %p231, %s13, 1
        %s233 = smul.addr %s232, 8
        %s234 = scalar_lea.vmem %s0, %s233
      $region44: #{transformer_audio_encoder.6} parent=39 // pred_fallthru
        _
    $region40: #{transformer_audio_encoder.6} parent=5 // pred_fallthru
      _
    %p235 = scmp.le.s32.totalorder 1, %s13
    %p236 = scmp.lt.s32.totalorder %s13, 3
    %p237 = pnand %p235, %p236
    %p238 = pneg %p237
    // Predicated region
    $region45: #{transformer_audio_encoder.6} parent=5 // pred_check
      _
    $region46: #{transformer_audio_encoder.6} parent=5 // pred_check_branch
      %240 = sbr.rel (%p237) target = $region48
    $region47: #{transformer_audio_encoder.6} parent=5 // pred_region
      %s241 = ssub.s32 %s13, 1
      %p242 = scmp.lt.s32.totalorder %s18, 1
      %s243 = scalar_select %p242, %s18, 1
      %s244 = smul.addr %s243, 8
      %s245 = scalar_lea.vmem %s0, %s244
      %p246 = pneg %p39
      %p247 = pneg %p36
      %p248 = pneg %p60
      %p249 = pneg %p57
      %p250 = pneg %p81
      %p251 = pneg %p78
      %p252 = pneg %p102
      %p253 = pneg %p99
      %p254 = pneg %p123
      %p255 = pneg %p120
      %p256 = pneg %p144
      %p257 = pneg %p141
      %p258 = pneg %p165
      %p259 = pneg %p162
      %p260 = pneg %p191
      %p261 = pneg %p188
      %p262 = scmp.lt.s32.totalorder %s18, 1
      %s263 = scalar_select %p262, %s18, 1
      %s264 = smul.addr %s263, 8
      %s265 = scalar_lea.vmem %s7, %s264
      %p266 = scmp.lt.s32.totalorder %s18, 1
      %s267 = scalar_select %p266, %s18, 1
      %s268 = smul.addr %s267, 8
      %s269 = scalar_lea.vmem %s0, %s268
      %p270 = scmp.lt.s32.totalorder %s18, 1
      %s271 = scalar_select %p270, %s18, 1
      %s272 = smul.addr %s271, 8
      %s273 = scalar_lea.vmem %s7, %s272
      %v275 = vld [vmem:[%s269] sm:$0xff]
      %v276 = vpack.c.bf16 %v275, %v275
      %v277 = vld [vmem:[%s1] sm:$0xf]
      %v278 = vld [vmem:[%s1 + $0x4] sm:$0xf]
      %v279 = vld [vmem:[%s1 + $0x8] sm:$0xf]
      %v280 = vld [vmem:[%s1 + $0xc] sm:$0xf]
      %v281 = vld [vmem:[%s2] sm:$0x1]
      %v283 = vlaneseq
      %v284 = vshrl.u32 %v283, 7
      %v285 = vsub.s32 0, %v284
      %v286 = vrot.slane %v281, %v285
      %v292 = vunpack.c.l.b16 %v277
      %v293 = vunpack.c.l.b16 %v278
      %v294 = vunpack.c.l.b16 %v279
      %v295 = vunpack.c.l.b16 %v280
      %v296 = vpack.c.b16 %v293, %v292
      %v297 = vpack.c.b16 %v295, %v294
      %vm300 = vcmask 261120
      %v302 = vsel %vm300, %v276, 0
      %304 = vmatprep.subr.bf16.mxu0 0
      %305 = vmatpush1.bf16.msra.mxu0 %v296
      %306 = vmatprep.subr.bf16.mxu0 0
      %307 = vmatpush1.bf16.msra.mxu0 %v297
      %308 = vmatprep.subr.bf16.mxu0 0
      %309 = vmatpush1.bf16.msra.mxu0 0
      %310 = vmatprep.subr.bf16.mxu0 0
      %311 = vmatpush1.bf16.msra.mxu0 0
      %312 = vmatprep.subr.bf16.mxu0 0
      %313 = vmatpush1.bf16.msra.mxu0 0
      %314 = vmatprep.subr.bf16.mxu0 0
      %315 = vmatpush1.bf16.msra.mxu0 0
      %316 = vmatprep.subr.bf16.mxu0 0
      %317 = vmatpush1.bf16.msra.mxu0 0
      %318 = vmatprep.subr.bf16.mxu0 0
      %319 = vmatpush1.bf16.msra.mxu0 0
      %320 = vmatprep.subr.bf16.mxu0 0
      %321 = vmatpush1.bf16.msra.mxu0 0
      %322 = vmatprep.subr.bf16.mxu0 0
      %323 = vmatpush1.bf16.msra.mxu0 0
      %324 = vmatprep.subr.bf16.mxu0 0
      %325 = vmatpush1.bf16.msra.mxu0 0
      %326 = vmatprep.subr.bf16.mxu0 0
      %327 = vmatpush1.bf16.msra.mxu0 0
      %328 = vmatprep.subr.bf16.mxu0 0
      %329 = vmatpush1.bf16.msra.mxu0 0
      %330 = vmatprep.subr.bf16.mxu0 0
      %331 = vmatpush1.bf16.msra.mxu0 0
      %332 = vmatprep.subr.bf16.mxu0 0
      %333 = vmatpush1.bf16.msra.mxu0 0
      %334 = vmatprep.subr.bf16.mxu0 0
      %335 = vmatpush1.bf16.msra.mxu0 0
      %336 = vmatprep.mubr.bf16.mxu0 0
      %337 = vmatmul.mubr.bf16.gmra.mrb[0].mxu0 %v302
      %v338 = vpop.f32.mrb[0].mxu0
      %v339 = vadd.f32 %v286, %v338
      %v340 = vpop.f32.mrb[0].mxu0
      %v341 = vpop.f32.mrb[0].mxu0
      %v342 = vpop.f32.mrb[0].mxu0
      %343 = vdwg.mxu0
      %v344 = vmul.f32 %v339, 0.35355338
      %v345 = vpack.c.bf16 %v344, %v344
      %v346 = vpack.c.bf16 %v339, %v339
      %348 = vrot.lane.b32.xlu0 %v346, 96
      %v349 = vpop.permute.xlu0 %348
      %vm350 = vcmask 64512
      %v352 = vsel %vm350, %v345, 0
      %v355 = vsel %vm350, %v349, 0
      %357 = vmatprep.subr.bf16.mxu0 0
      %358 = vmatpush1.bf16.xpose.msra.mxu0 %v355
      %359 = vmatprep.subr.bf16.mxu0 0
      %360 = vmatpush1.bf16.xpose.msra.mxu0 0
      %361 = vmatprep.subr.bf16.mxu0 0
      %362 = vmatpush1.bf16.xpose.msra.mxu0 0
      %363 = vmatprep.subr.bf16.mxu0 0
      %364 = vmatpush1.bf16.xpose.msra.mxu0 0
      %365 = vmatprep.subr.bf16.mxu0 0
      %366 = vmatpush1.bf16.xpose.msra.mxu0 0
      %367 = vmatprep.subr.bf16.mxu0 0
      %368 = vmatpush1.bf16.xpose.msra.mxu0 0
      %369 = vmatprep.subr.bf16.mxu0 0
      %370 = vmatpush1.bf16.xpose.msra.mxu0 0
      %371 = vmatprep.subr.bf16.mxu0 0
      %372 = vmatpush1.bf16.xpose.msra.mxu0 0
      %373 = vmatprep.subr.bf16.mxu0 0
      %374 = vmatpush1.bf16.xpose.msra.mxu0 0
      %375 = vmatprep.subr.bf16.mxu0 0
      %376 = vmatpush1.bf16.xpose.msra.mxu0 0
      %377 = vmatprep.subr.bf16.mxu0 0
      %378 = vmatpush1.bf16.xpose.msra.mxu0 0
      %379 = vmatprep.subr.bf16.mxu0 0
      %380 = vmatpush1.bf16.xpose.msra.mxu0 0
      %381 = vmatprep.subr.bf16.mxu0 0
      %382 = vmatpush1.bf16.xpose.msra.mxu0 0
      %383 = vmatprep.subr.bf16.mxu0 0
      %384 = vmatpush1.bf16.xpose.msra.mxu0 0
      %385 = vmatprep.subr.bf16.mxu0 0
      %386 = vmatpush1.bf16.xpose.msra.mxu0 0
      %387 = vmatprep.subr.bf16.mxu0 0
      %388 = vmatpush1.bf16.xpose.msra.mxu0 0
      %389 = vmatprep.mubr.bf16.mxu0 0
      %390 = vmatmul.mubr.bf16.gmra.mrb[0].mxu0 %v352
      %v391 = vpop.f32.mrb[0].mxu0
      %v392 = vadd.f32 0.0, %v391
      %v393 = vpop.f32.mrb[0].mxu0
      %v394 = vpop.f32.mrb[0].mxu0
      %v395 = vpop.f32.mrb[0].mxu0
      %396 = vdwg.mxu0
      %v397 = vsel %vm350, %v392, -inf
      %398 = vmax.xlane.f32.xlu0 %v397
      %v399 = vpop.xlane.xlu0 %398
      %v400 = vsub.f32 %v392, %v399
      %v401 = vmul.f32 %v400, 1.442695
      %v402 = vpow.pop %v401
      %v403 = vsel %vm350, %v402, 0.0
      %404 = vadd.xlane.f32.xlu0 %v403
      %v405 = vpop.xlane.xlu0 %404
      %v406 = vrcp.pop %v405
      %v407 = vmul.f32 %v402, %v406
      %v408 = vpack.c.bf16 %v407, %v407
      %409 = vrot.lane.b32.xlu0 %v346, 64
      %v410 = vpop.permute.xlu0 %409
      %v412 = vsel %vm350, %v408, 0
      %vm414 = vcmask 1043456
      %v416 = vsel %vm414, %v410, 0
      %418 = vmatprep.subr.bf16.mxu0 0
      %419 = vmatpush1.bf16.msra.mxu0 %v416
      %420 = vmatprep.subr.bf16.mxu0 0
      %421 = vmatpush1.bf16.msra.mxu0 0
      %422 = vmatprep.subr.bf16.mxu0 0
      %423 = vmatpush1.bf16.msra.mxu0 0
      %424 = vmatprep.subr.bf16.mxu0 0
      %425 = vmatpush1.bf16.msra.mxu0 0
      %426 = vmatprep.subr.bf16.mxu0 0
      %427 = vmatpush1.bf16.msra.mxu0 0
      %428 = vmatprep.subr.bf16.mxu0 0
      %429 = vmatpush1.bf16.msra.mxu0 0
      %430 = vmatprep.subr.bf16.mxu0 0
      %431 = vmatpush1.bf16.msra.mxu0 0
      %432 = vmatprep.subr.bf16.mxu0 0
      %433 = vmatpush1.bf16.msra.mxu0 0
      %434 = vmatprep.subr.bf16.mxu0 0
      %435 = vmatpush1.bf16.msra.mxu0 0
      %436 = vmatprep.subr.bf16.mxu0 0
      %437 = vmatpush1.bf16.msra.mxu0 0
      %438 = vmatprep.subr.bf16.mxu0 0
      %439 = vmatpush1.bf16.msra.mxu0 0
      %440 = vmatprep.subr.bf16.mxu0 0
      %441 = vmatpush1.bf16.msra.mxu0 0
      %442 = vmatprep.subr.bf16.mxu0 0
      %443 = vmatpush1.bf16.msra.mxu0 0
      %444 = vmatprep.subr.bf16.mxu0 0
      %445 = vmatpush1.bf16.msra.mxu0 0
      %446 = vmatprep.subr.bf16.mxu0 0
      %447 = vmatpush1.bf16.msra.mxu0 0
      %448 = vmatprep.subr.bf16.mxu0 0
      %449 = vmatpush1.bf16.msra.mxu0 0
      %450 = vmatprep.mubr.bf16.mxu0 0
      %451 = vmatmul.mubr.bf16.gmra.mrb[0].mxu0 %v412
      %v452 = vpop.f32.mrb[0].mxu0
      %v453 = vadd.f32 0.0, %v452
      %v454 = vpop.f32.mrb[0].mxu0
      %v455 = vpop.f32.mrb[0].mxu0
      %v456 = vpop.f32.mrb[0].mxu0
      %457 = vdwg.mxu0
      %459 = vrot.lane.b32.xlu0 %v345, 120
      %v460 = vpop.permute.xlu0 %459
      %461 = vrot.lane.b32.xlu0 %v346, 88
      %v462 = vpop.permute.xlu0 %461
      %v464 = vsel %vm350, %v460, 0
      %v467 = vsel %vm350, %v462, 0
      %469 = vmatprep.subr.bf16.mxu0 0
      %470 = vmatpush1.bf16.xpose.msra.mxu0 %v467
      %471 = vmatprep.subr.bf16.mxu0 0
      %472 = vmatpush1.bf16.xpose.msra.mxu0 0
      %473 = vmatprep.subr.bf16.mxu0 0
      %474 = vmatpush1.bf16.xpose.msra.mxu0 0
      %475 = vmatprep.subr.bf16.mxu0 0
      %476 = vmatpush1.bf16.xpose.msra.mxu0 0
      %477 = vmatprep.subr.bf16.mxu0 0
      %478 = vmatpush1.bf16.xpose.msra.mxu0 0
      %479 = vmatprep.subr.bf16.mxu0 0
      %480 = vmatpush1.bf16.xpose.msra.mxu0 0
      %481 = vmatprep.subr.bf16.mxu0 0
      %482 = vmatpush1.bf16.xpose.msra.mxu0 0
      %483 = vmatprep.subr.bf16.mxu0 0
      %484 = vmatpush1.bf16.xpose.msra.mxu0 0
      %485 = vmatprep.subr.bf16.mxu0 0
      %486 = vmatpush1.bf16.xpose.msra.mxu0 0
      %487 = vmatprep.subr.bf16.mxu0 0
      %488 = vmatpush1.bf16.xpose.msra.mxu0 0
      %489 = vmatprep.subr.bf16.mxu0 0
      %490 = vmatpush1.bf16.xpose.msra.mxu0 0
      %491 = vmatprep.subr.bf16.mxu0 0
      %492 = vmatpush1.bf16.xpose.msra.mxu0 0
      %493 = vmatprep.subr.bf16.mxu0 0
      %494 = vmatpush1.bf16.xpose.msra.mxu0 0
      %495 = vmatprep.subr.bf16.mxu0 0
      %496 = vmatpush1.bf16.xpose.msra.mxu0 0
      %497 = vmatprep.subr.bf16.mxu0 0
      %498 = vmatpush1.bf16.xpose.msra.mxu0 0
      %499 = vmatprep.subr.bf16.mxu0 0
      %500 = vmatpush1.bf16.xpose.msra.mxu0 0
      %501 = vmatprep.mubr.bf16.mxu0 0
      %502 = vmatmul.mubr.bf16.gmra.mrb[0].mxu0 %v464
      %v503 = vpop.f32.mrb[0].mxu0
      %v504 = vadd.f32 0.0, %v503
      %v505 = vpop.f32.mrb[0].mxu0
      %v506 = vpop.f32.mrb[0].mxu0
      %v507 = vpop.f32.mrb[0].mxu0
      %508 = vdwg.mxu0
      %v509 = vsel %vm350, %v504, -inf
      %510 = vmax.xlane.f32.xlu0 %v509
      %v511 = vpop.xlane.xlu0 %510
      %v512 = vsub.f32 %v504, %v511
      %v513 = vmul.f32 %v512, 1.442695
      %v514 = vpow.pop %v513
      %v515 = vsel %vm350, %v514, 0.0
      %516 = vadd.xlane.f32.xlu0 %v515
      %v517 = vpop.xlane.xlu0 %516
      %v518 = vrcp.pop %v517
      %v519 = vmul.f32 %v514, %v518
      %v520 = vpack.c.bf16 %v519, %v519
      %521 = vrot.lane.b32.xlu0 %v346, 56
      %v522 = vpop.permute.xlu0 %521
      %v524 = vsel %vm350, %v520, 0
      %v527 = vsel %vm414, %v522, 0
      %529 = vmatprep.subr.bf16.mxu0 0
      %530 = vmatpush1.bf16.msra.mxu0 %v527
      %531 = vmatprep.subr.bf16.mxu0 0
      %532 = vmatpush1.bf16.msra.mxu0 0
      %533 = vmatprep.subr.bf16.mxu0 0
      %534 = vmatpush1.bf16.msra.mxu0 0
      %535 = vmatprep.subr.bf16.mxu0 0
      %536 = vmatpush1.bf16.msra.mxu0 0
      %537 = vmatprep.subr.bf16.mxu0 0
      %538 = vmatpush1.bf16.msra.mxu0 0
      %539 = vmatprep.subr.bf16.mxu0 0
      %540 = vmatpush1.bf16.msra.mxu0 0
      %541 = vmatprep.subr.bf16.mxu0 0
      %542 = vmatpush1.bf16.msra.mxu0 0
      %543 = vmatprep.subr.bf16.mxu0 0
      %544 = vmatpush1.bf16.msra.mxu0 0
      %545 = vmatprep.subr.bf16.mxu0 0
      %546 = vmatpush1.bf16.msra.mxu0 0
      %547 = vmatprep.subr.bf16.mxu0 0
      %548 = vmatpush1.bf16.msra.mxu0 0
      %549 = vmatprep.subr.bf16.mxu0 0
      %550 = vmatpush1.bf16.msra.mxu0 0
      %551 = vmatprep.subr.bf16.mxu0 0
      %552 = vmatpush1.bf16.msra.mxu0 0
      %553 = vmatprep.subr.bf16.mxu0 0
      %554 = vmatpush1.bf16.msra.mxu0 0
      %555 = vmatprep.subr.bf16.mxu0 0
      %556 = vmatpush1.bf16.msra.mxu0 0
      %557 = vmatprep.subr.bf16.mxu0 0
      %558 = vmatpush1.bf16.msra.mxu0 0
      %559 = vmatprep.subr.bf16.mxu0 0
      %560 = vmatpush1.bf16.msra.mxu0 0
      %561 = vmatprep.mubr.bf16.mxu0 0
      %562 = vmatmul.mubr.bf16.gmra.mrb[0].mxu0 %v524
      %v563 = vpop.f32.mrb[0].mxu0
      %v564 = vadd.f32 0.0, %v563
      %v565 = vpop.f32.mrb[0].mxu0
      %v566 = vpop.f32.mrb[0].mxu0
      %v567 = vpop.f32.mrb[0].mxu0
      %568 = vdwg.mxu0
      %569 = vrot.lane.b32.xlu0 %v345, 112
      %v570 = vpop.permute.xlu0 %569
      %571 = vrot.lane.b32.xlu0 %v346, 80
      %v572 = vpop.permute.xlu0 %571
      %v574 = vsel %vm350, %v570, 0
      %v577 = vsel %vm350, %v572, 0
      %579 = vmatprep.subr.bf16.mxu0 0
      %580 = vmatpush1.bf16.xpose.msra.mxu0 %v577
      %581 = vmatprep.subr.bf16.mxu0 0
      %582 = vmatpush1.bf16.xpose.msra.mxu0 0
      %583 = vmatprep.subr.bf16.mxu0 0
      %584 = vmatpush1.bf16.xpose.msra.mxu0 0
      %585 = vmatprep.subr.bf16.mxu0 0
      %586 = vmatpush1.bf16.xpose.msra.mxu0 0
      %587 = vmatprep.subr.bf16.mxu0 0
      %588 = vmatpush1.bf16.xpose.msra.mxu0 0
      %589 = vmatprep.subr.bf16.mxu0 0
      %590 = vmatpush1.bf16.xpose.msra.mxu0 0
      %591 = vmatprep.subr.bf16.mxu0 0
      %592 = vmatpush1.bf16.xpose.msra.mxu0 0
      %593 = vmatprep.subr.bf16.mxu0 0
      %594 = vmatpush1.bf16.xpose.msra.mxu0 0
      %595 = vmatprep.subr.bf16.mxu0 0
      %596 = vmatpush1.bf16.xpose.msra.mxu0 0
      %597 = vmatprep.subr.bf16.mxu0 0
      %598 = vmatpush1.bf16.xpose.msra.mxu0 0
      %599 = vmatprep.subr.bf16.mxu0 0
      %600 = vmatpush1.bf16.xpose.msra.mxu0 0
      %601 = vmatprep.subr.bf16.mxu0 0
      %602 = vmatpush1.bf16.xpose.msra.mxu0 0
      %603 = vmatprep.subr.bf16.mxu0 0
      %604 = vmatpush1.bf16.xpose.msra.mxu0 0
      %605 = vmatprep.subr.bf16.mxu0 0
      %606 = vmatpush1.bf16.xpose.msra.mxu0 0
      %607 = vmatprep.subr.bf16.mxu0 0
      %608 = vmatpush1.bf16.xpose.msra.mxu0 0
      %609 = vmatprep.subr.bf16.mxu0 0
      %610 = vmatpush1.bf16.xpose.msra.mxu0 0
      %611 = vmatprep.mubr.bf16.mxu0 0
      %612 = vmatmul.mubr.bf16.gmra.mrb[0].mxu0 %v574
      %v613 = vpop.f32.mrb[0].mxu0
      %v614 = vadd.f32 0.0, %v613
      %v615 = vpop.f32.mrb[0].mxu0
      %v616 = vpop.f32.mrb[0].mxu0
      %v617 = vpop.f32.mrb[0].mxu0
      %618 = vdwg.mxu0
      %v619 = vsel %vm350, %v614, -inf
      %620 = vmax.xlane.f32.xlu0 %v619
      %v621 = vpop.xlane.xlu0 %620
      %v622 = vsub.f32 %v614, %v621
      %v623 = vmul.f32 %v622, 1.442695
      %v624 = vpow.pop %v623
      %v625 = vsel %vm350, %v624, 0.0
      %626 = vadd.xlane.f32.xlu0 %v625
      %v627 = vpop.xlane.xlu0 %626
      %v628 = vrcp.pop %v627
      %v629 = vmul.f32 %v624, %v628
      %v630 = vpack.c.bf16 %v629, %v629
      %631 = vrot.lane.b32.xlu0 %v346, 48
      %v632 = vpop.permute.xlu0 %631
      %v634 = vsel %vm350, %v630, 0
      %v637 = vsel %vm414, %v632, 0
      %639 = vmatprep.subr.bf16.mxu0 0
      %640 = vmatpush1.bf16.msra.mxu0 %v637
      %641 = vmatprep.subr.bf16.mxu0 0
      %642 = vmatpush1.bf16.msra.mxu0 0
      %643 = vmatprep.subr.bf16.mxu0 0
      %644 = vmatpush1.bf16.msra.mxu0 0
      %645 = vmatprep.subr.bf16.mxu0 0
      %646 = vmatpush1.bf16.msra.mxu0 0
      %647 = vmatprep.subr.bf16.mxu0 0
      %648 = vmatpush1.bf16.msra.mxu0 0
      %649 = vmatprep.subr.bf16.mxu0 0
      %650 = vmatpush1.bf16.msra.mxu0 0
      %651 = vmatprep.subr.bf16.mxu0 0
      %652 = vmatpush1.bf16.msra.mxu0 0
      %653 = vmatprep.subr.bf16.mxu0 0
      %654 = vmatpush1.bf16.msra.mxu0 0
      %655 = vmatprep.subr.bf16.mxu0 0
      %656 = vmatpush1.bf16.msra.mxu0 0
      %657 = vmatprep.subr.bf16.mxu0 0
      %658 = vmatpush1.bf16.msra.mxu0 0
      %659 = vmatprep.subr.bf16.mxu0 0
      %660 = vmatpush1.bf16.msra.mxu0 0
      %661 = vmatprep.subr.bf16.mxu0 0
      %662 = vmatpush1.bf16.msra.mxu0 0
      %663 = vmatprep.subr.bf16.mxu0 0
      %664 = vmatpush1.bf16.msra.mxu0 0
      %665 = vmatprep.subr.bf16.mxu0 0
      %666 = vmatpush1.bf16.msra.mxu0 0
      %667 = vmatprep.subr.bf16.mxu0 0
      %668 = vmatpush1.bf16.msra.mxu0 0
      %669 = vmatprep.subr.bf16.mxu0 0
      %670 = vmatpush1.bf16.msra.mxu0 0
      %671 = vmatprep.mubr.bf16.mxu0 0
      %672 = vmatmul.mubr.bf16.gmra.mrb[0].mxu0 %v634
      %v673 = vpop.f32.mrb[0].mxu0
      %v674 = vadd.f32 0.0, %v673
      %v675 = vpop.f32.mrb[0].mxu0
      %v676 = vpop.f32.mrb[0].mxu0
      %v677 = vpop.f32.mrb[0].mxu0
      %678 = vdwg.mxu0
      %679 = vrot.lane.b32.xlu0 %v345, 104
      %v680 = vpop.permute.xlu0 %679
      %681 = vrot.lane.b32.xlu0 %v346, 72
      %v682 = vpop.permute.xlu0 %681
      %v684 = vsel %vm350, %v680, 0
      %v687 = vsel %vm350, %v682, 0
      %689 = vmatprep.subr.bf16.mxu0 0
      %690 = vmatpush1.bf16.xpose.msra.mxu0 %v687
      %691 = vmatprep.subr.bf16.mxu0 0
      %692 = vmatpush1.bf16.xpose.msra.mxu0 0
      %693 = vmatprep.subr.bf16.mxu0 0
      %694 = vmatpush1.bf16.xpose.msra.mxu0 0
      %695 = vmatprep.subr.bf16.mxu0 0
      %696 = vmatpush1.bf16.xpose.msra.mxu0 0
      %697 = vmatprep.subr.bf16.mxu0 0
      %698 = vmatpush1.bf16.xpose.msra.mxu0 0
      %699 = vmatprep.subr.bf16.mxu0 0
      %700 = vmatpush1.bf16.xpose.msra.mxu0 0
      %701 = vmatprep.subr.bf16.mxu0 0
      %702 = vmatpush1.bf16.xpose.msra.mxu0 0
      %703 = vmatprep.subr.bf16.mxu0 0
      %704 = vmatpush1.bf16.xpose.msra.mxu0 0
      %705 = vmatprep.subr.bf16.mxu0 0
      %706 = vmatpush1.bf16.xpose.msra.mxu0 0
      %707 = vmatprep.subr.bf16.mxu0 0
      %708 = vmatpush1.bf16.xpose.msra.mxu0 0
      %709 = vmatprep.subr.bf16.mxu0 0
      %710 = vmatpush1.bf16.xpose.msra.mxu0 0
      %711 = vmatprep.subr.bf16.mxu0 0
      %712 = vmatpush1.bf16.xpose.msra.mxu0 0
      %713 = vmatprep.subr.bf16.mxu0 0
      %714 = vmatpush1.bf16.xpose.msra.mxu0 0
      %715 = vmatprep.subr.bf16.mxu0 0
      %716 = vmatpush1.bf16.xpose.msra.mxu0 0
      %717 = vmatprep.subr.bf16.mxu0 0
      %718 = vmatpush1.bf16.xpose.msra.mxu0 0
      %719 = vmatprep.subr.bf16.mxu0 0
      %720 = vmatpush1.bf16.xpose.msra.mxu0 0
      %721 = vmatprep.mubr.bf16.mxu0 0
      %722 = vmatmul.mubr.bf16.gmra.mrb[0].mxu0 %v684
      %v723 = vpop.f32.mrb[0].mxu0
      %v724 = vadd.f32 0.0, %v723
      %v725 = vpop.f32.mrb[0].mxu0
      %v726 = vpop.f32.mrb[0].mxu0
      %v727 = vpop.f32.mrb[0].mxu0
      %728 = vdwg.mxu0
      %v729 = vsel %vm350, %v724, -inf
      %730 = vmax.xlane.f32.xlu0 %v729
      %v731 = vpop.xlane.xlu0 %730
      %v732 = vsub.f32 %v724, %v731
      %v733 = vmul.f32 %v732, 1.442695
      %v734 = vpow.pop %v733
      %v735 = vsel %vm350, %v734, 0.0
      %736 = vadd.xlane.f32.xlu0 %v735
      %v737 = vpop.xlane.xlu0 %736
      %v738 = vrcp.pop %v737
      %v739 = vmul.f32 %v734, %v738
      %v740 = vpack.c.bf16 %v739, %v739
      %741 = vrot.lane.b32.xlu0 %v346, 40
      %v742 = vpop.permute.xlu0 %741
      %v744 = vsel %vm350, %v740, 0
      %v747 = vsel %vm414, %v742, 0
      %749 = vmatprep.subr.bf16.mxu0 0
      %750 = vmatpush1.bf16.msra.mxu0 %v747
      %751 = vmatprep.subr.bf16.mxu0 0
      %752 = vmatpush1.bf16.msra.mxu0 0
      %753 = vmatprep.subr.bf16.mxu0 0
      %754 = vmatpush1.bf16.msra.mxu0 0
      %755 = vmatprep.subr.bf16.mxu0 0
      %756 = vmatpush1.bf16.msra.mxu0 0
      %757 = vmatprep.subr.bf16.mxu0 0
      %758 = vmatpush1.bf16.msra.mxu0 0
      %759 = vmatprep.subr.bf16.mxu0 0
      %760 = vmatpush1.bf16.msra.mxu0 0
      %761 = vmatprep.subr.bf16.mxu0 0
      %762 = vmatpush1.bf16.msra.mxu0 0
      %763 = vmatprep.subr.bf16.mxu0 0
      %764 = vmatpush1.bf16.msra.mxu0 0
      %765 = vmatprep.subr.bf16.mxu0 0
      %766 = vmatpush1.bf16.msra.mxu0 0
      %767 = vmatprep.subr.bf16.mxu0 0
      %768 = vmatpush1.bf16.msra.mxu0 0
      %769 = vmatprep.subr.bf16.mxu0 0
      %770 = vmatpush1.bf16.msra.mxu0 0
      %771 = vmatprep.subr.bf16.mxu0 0
      %772 = vmatpush1.bf16.msra.mxu0 0
      %773 = vmatprep.subr.bf16.mxu0 0
      %774 = vmatpush1.bf16.msra.mxu0 0
      %775 = vmatprep.subr.bf16.mxu0 0
      %776 = vmatpush1.bf16.msra.mxu0 0
      %777 = vmatprep.subr.bf16.mxu0 0
      %778 = vmatpush1.bf16.msra.mxu0 0
      %779 = vmatprep.subr.bf16.mxu0 0
      %780 = vmatpush1.bf16.msra.mxu0 0
      %781 = vmatprep.mubr.bf16.mxu0 0
      %782 = vmatmul.mubr.bf16.gmra.mrb[0].mxu0 %v744
      %v783 = vpop.f32.mrb[0].mxu0
      %v784 = vadd.f32 0.0, %v783
      %v785 = vpop.f32.mrb[0].mxu0
      %v786 = vpop.f32.mrb[0].mxu0
      %v787 = vpop.f32.mrb[0].mxu0
      %788 = vdwg.mxu0
      %790 = vrot.lane.b32.xlu0 %v564, 8
      %v791 = vpop.permute.xlu0 %790
      %794 = vrot.lane.b32.xlu0 %v674, 16
      %v795 = vpop.permute.xlu0 %794
      %798 = vrot.lane.b32.xlu0 %v784, 24
      %v799 = vpop.permute.xlu0 %798
      %v801 = vsel %vm350, %v453, %v791
      %vm802 = vcmask 130048
      %v803 = vsel %vm802, %v801, %v795
      %vm804 = vcmask 195584
      %v805 = vsel %vm804, %v803, %v799
      %v806 = vpack.c.bf16 %v805, %v805
      %v807 = vld [vmem:[%s3] sm:$0xf]
      %v808 = vld [vmem:[%s3 + $0x4] sm:$0xf]
      %v809 = vld [vmem:[%s3 + $0x8] sm:$0xf]
      %v810 = vld [vmem:[%s3 + $0xc] sm:$0xf]
      %v811 = vld [vmem:[%s4] sm:$0x1]
      %v813 = vlaneseq
      %v814 = vshrl.u32 %v813, 7
      %v815 = vsub.s32 0, %v814
      %v816 = vrot.slane %v811, %v815
      %v822 = vunpack.c.l.b16 %v807
      %v823 = vunpack.c.l.b16 %v808
      %v824 = vunpack.c.l.b16 %v809
      %v825 = vunpack.c.l.b16 %v810
      %v826 = vpack.c.b16 %v823, %v822
      %v827 = vpack.c.b16 %v825, %v824
      %v831 = vsel %vm300, %v806, 0
      %833 = vmatprep.subr.bf16.mxu0 0
      %834 = vmatpush1.bf16.msra.mxu0 %v826
      %835 = vmatprep.subr.bf16.mxu0 0
      %836 = vmatpush1.bf16.msra.mxu0 %v827
      %837 = vmatprep.subr.bf16.mxu0 0
      %838 = vmatpush1.bf16.msra.mxu0 0
      %839 = vmatprep.subr.bf16.mxu0 0
      %840 = vmatpush1.bf16.msra.mxu0 0
      %841 = vmatprep.subr.bf16.mxu0 0
      %842 = vmatpush1.bf16.msra.mxu0 0
      %843 = vmatprep.subr.bf16.mxu0 0
      %844 = vmatpush1.bf16.msra.mxu0 0
      %845 = vmatprep.subr.bf16.mxu0 0
      %846 = vmatpush1.bf16.msra.mxu0 0
      %847 = vmatprep.subr.bf16.mxu0 0
      %848 = vmatpush1.bf16.msra.mxu0 0
      %849 = vmatprep.subr.bf16.mxu0 0
      %850 = vmatpush1.bf16.msra.mxu0 0
      %851 = vmatprep.subr.bf16.mxu0 0
      %852 = vmatpush1.bf16.msra.mxu0 0
      %853 = vmatprep.subr.bf16.mxu0 0
      %854 = vmatpush1.bf16.msra.mxu0 0
      %855 = vmatprep.subr.bf16.mxu0 0
      %856 = vmatpush1.bf16.msra.mxu0 0
      %857 = vmatprep.subr.bf16.mxu0 0
      %858 = vmatpush1.bf16.msra.mxu0 0
      %859 = vmatprep.subr.bf16.mxu0 0
      %860 = vmatpush1.bf16.msra.mxu0 0
      %861 = vmatprep.subr.bf16.mxu0 0
      %862 = vmatpush1.bf16.msra.mxu0 0
      %863 = vmatprep.subr.bf16.mxu0 0
      %864 = vmatpush1.bf16.msra.mxu0 0
      %865 = vmatprep.mubr.bf16.mxu0 0
      %866 = vmatmul.mubr.bf16.gmra.mrb[0].mxu0 %v831
      %v867 = vpop.f32.mrb[0].mxu0
      %v868 = vadd.f32 %v816, %v867
      %v869 = vpop.f32.mrb[0].mxu0
      %v870 = vpop.f32.mrb[0].mxu0
      %v871 = vpop.f32.mrb[0].mxu0
      %872 = vdwg.mxu0
      %v873 = vadd.f32 %v275, %v868
      %v874 = vsel %vm300, %v873, 0.0
      %875 = vadd.xlane.f32.xlu0 %v874
      %v876 = vpop.xlane.xlu0 %875
      %v877 = vrcp.pop 32.0
      %v878 = vmul.f32 %v876, %v877
      %v879 = vsub.f32 %v873, %v878
      %v880 = vmul.f32 %v879, %v879
      %v881 = vsel %vm300, %v880, 0.0
      %882 = vadd.xlane.f32.xlu0 %v881
      %v883 = vpop.xlane.xlu0 %882
      %v884 = vmul.f32 %v883, %v877
      %v885 = vadd.f32 %v884, 1e-05
      %v886 = vrsqrt.pop %v885
      %v887 = vmul.f32 %v879, %v886
      %v888 = vld [vmem:[%s5] sm:$0x1]
      %v890 = vlaneseq
      %v891 = vshrl.u32 %v890, 7
      %v892 = vsub.s32 0, %v891
      %v893 = vrot.slane %v888, %v892
      %v895 = vmul.f32 %v887, %v893
      %v896 = vld [vmem:[%s6] sm:$0x1]
      %v898 = vlaneseq
      %v899 = vshrl.u32 %v898, 7
      %v900 = vsub.s32 0, %v899
      %v901 = vrot.slane %v896, %v900
      %v903 = vadd.f32 %v895, %v901
      %904 = vst.msk [vmem:[%s273] sm:$0xff] %vm300, %v903
      %p905 = scmp.lt.s32.totalorder %s18, 1
      %s906 = scalar_select %p905, %s18, 1
      %s907 = smul.addr %s906, 8
      %s908 = scalar_lea.vmem %s7, %s907
      // Predicated region
      $region49: #{transformer_audio_encoder.6} parent=47 // pred_check
        %p909 = pneg %p188
      $region50: #{transformer_audio_encoder.6} parent=47 // pred_check_branch
        %911 = sbr.rel (%p909) target = $region52
      $region51: #{transformer_audio_encoder.6} parent=47 // pred_region
        _
      $region52: #{transformer_audio_encoder.6} parent=47 // pred_fallthru
        _
    $region48: #{transformer_audio_encoder.6} parent=5 // pred_fallthru
      _
    %p912 = scmp.le.s32.totalorder 2, %s13
    // Predicated region
    $region53: #{transformer_audio_encoder.6} parent=5 // pred_check
      %p913 = pneg %p912
    $region54: #{transformer_audio_encoder.6} parent=5 // pred_check_branch
      %915 = sbr.rel (%p913) target = $region56
    $region55: #{transformer_audio_encoder.6} parent=5 // pred_region
      %s916 = ssub.s32 %s13, 2
      // Predicated region
      $region57: #{transformer_audio_encoder.6} parent=55 // pred_check
        %p917 = pneg %p194
      $region58: #{transformer_audio_encoder.6} parent=55 // pred_check_branch
        %919 = sbr.rel (%p917) target = $region60
      $region59: #{transformer_audio_encoder.6} parent=55 // pred_region
        %p920 = scmp.lt.s32.totalorder %s19, 1
        %s921 = scalar_select %p920, %s19, 1
        %s922 = smul.addr %s921, 8
        %s923 = scalar_lea.vmem %s7, %s922
      $region60: #{transformer_audio_encoder.6} parent=55 // pred_fallthru
        _
    $region56: #{transformer_audio_encoder.6} parent=5 // pred_fallthru
      _
  $region6: #{transformer_audio_encoder.6} parent=0 // loop_footer
    %s17 = sadd.s32 1, %s13
  $region7: #{transformer_audio_encoder.6} parent=0 // loop_footer_branch
    %12 = sbr.rel target = $region3
  $region8: #{transformer_audio_encoder.6} parent=0 // loop_exit
    _

</llo_original>
